<compile_context>
chip_gen: v7x
topology: tpu7x:2x2x1
jax: 0.10.0
libtpu: 0.0.40
codegen_flags: <defaults>
</compile_context>

<pallas_src>
import functools

import numpy as np
import jax
import jax.numpy as jnp
from jax import lax
from jax.experimental import pallas as pl
from jax.experimental.pallas import tpu as pltpu


def _sigmoid(v):
    # sigmoid(v) == 0.5 * (tanh(v/2) + 1): tanh runs on the EUP slot, no VALU divide chain.
    return 0.5 * (jnp.tanh(0.5 * v) + 1.0)


def _mid_ode_kernel(tt, hp, delta_t,
                    steps_ref,          # scalar prefetch (SMEM): (TP,) int32 Euler trip counts
                    gi_ref,             # (TT, BP, 3*HP) f32  -- hoisted x@W_ih^T + b_ih (+ b_hh r,z)
                    w_ode_rz_ref,       # (HP, 2*HP) compute dtype  [r | z]
                    w_ode_u_ref,        # (HP, HP)   compute dtype
                    w_hh_ref,           # (HP, 3*HP) compute dtype  [r | z | n]
                    b_hn_ref,           # (1, HP)    f32  (n-gate hidden bias; must stay inside r*(...))
                    out_ref,            # (TT, BP, HP) H.dtype
                    h_ref):             # scratch (BP, HP) f32, carried across grid steps
    c = pl.program_id(0)
    cdt = w_ode_rz_ref.dtype

    @pl.when(c == 0)
    def _():
        h_ref[...] = jnp.zeros_like(h_ref)

    def euler_step(_, h):
        rz = jnp.dot(h.astype(cdt), w_ode_rz_ref[...],
                     preferred_element_type=jnp.float32)               # (BP, 2*HP)
        r = _sigmoid(rz[:, 0:hp])
        z = _sigmoid(rz[:, hp:2 * hp])
        u = jnp.tanh(jnp.dot((r * h).astype(cdt), w_ode_u_ref[...],
                             preferred_element_type=jnp.float32))      # (BP, HP)
        return h + delta_t * (1.0 - z) * (u - h)

    def time_step(t, h):
        # ---- GRU-ODE Euler evolution up to this observation (trip count from SMEM) ----
        h = lax.fori_loop(0, steps_ref[c * tt + t], euler_step, h)
        # ---- torch.nn.GRU single observation step (gate order r, z, n) ----
        gi = gi_ref[t]                                                 # (BP, 3*HP) f32
        gh = jnp.dot(h.astype(cdt), w_hh_ref[...],
                     preferred_element_type=jnp.float32)               # (BP, 3*HP)
        r = _sigmoid(gi[:, 0:hp] + gh[:, 0:hp])
        z = _sigmoid(gi[:, hp:2 * hp] + gh[:, hp:2 * hp])
        n = jnp.tanh(gi[:, 2 * hp:3 * hp] + r * (gh[:, 2 * hp:3 * hp] + b_hn_ref[...]))
        h_new = (1.0 - z) * n + z * h
        out_ref[t] = h_new.astype(out_ref.dtype)
        return h_new

    h_ref[...] = lax.fori_loop(0, tt, time_step, h_ref[...])


def mid_ode_forward(H, times, params, *, hidden_size, delta_t,
                    solver="euler", compute_dtype=jnp.bfloat16):
    """H: (B, T, D) with D == hidden_size, times: (B, T) -> out: (B, T, D)."""
    if solver != "euler":
        raise NotImplementedError("only solver='euler' is supported")

    B, T, D = H.shape
    assert D == hidden_size, "Mid_ODENetwork's out[:, idx, :] assignment needs gru_input_size == hidden_size"
    hs = hidden_size
    HP = ((hs + 127) // 128) * 128            # lane-dense (128-aligned) hidden dim
    BP = ((B + 7) // 8) * 8                   # sublane-aligned batch
    f32 = jnp.float32
    cdt = jnp.dtype(compute_dtype)
    out_dtype = H.dtype

    # ---- Euler trip counts: exact float64 host replica of the PyTorch host while loop ----
    t_host = np.asarray(jax.device_get(times), dtype=np.float64)
    current = float(t_host[0, 0]) - 1.0
    steps_host = []
    for idx in range(T):
        obs = float(t_host[0, idx])
        n = 0
        while current < obs - 0.001 * delta_t:
            current += delta_t
            n += 1
        steps_host.append(n)

    # ---- time-chunk size: whole sequence in one grid step whenever it fits in VMEM ----
    per_t_bytes = BP * (3 * HP * 4 + HP * jnp.dtype(out_dtype).itemsize)
    TT = int(max(1, min(T, (2 << 20) // max(per_t_bytes, 1))))
    n_chunks = -(-T // TT)
    TP = n_chunks * TT

    steps = jnp.asarray(steps_host + [0] * (TP - T), dtype=jnp.int32)              # (TP,)

    # ---- hoisted input projection: one big (B*T, D)@(D, 3*hs) matmul in plain XLA ----
    W_ih = params["gru_w_ih"].astype(f32)                                           # (3*hs, D)
    b_comb = params["gru_b_ih"].astype(f32) + jnp.concatenate(
        [params["gru_b_hh"][:2 * hs].astype(f32), jnp.zeros((hs,), f32)])
    gi_raw = jnp.einsum("btd,gd->btg", H.astype(f32), W_ih) + b_comb                # (B, T, 3*hs)
    gi_t = jnp.transpose(gi_raw, (1, 0, 2))                                         # (T, B, 3*hs)
    gi_p = jnp.zeros((TP, BP, 3 * HP), f32)
    for g in range(3):                                                               # gates r, z, n
        gi_p = gi_p.at[:T, :B, g * HP:g * HP + hs].set(gi_t[:, :, g * hs:(g + 1) * hs])

    # ---- padded, lane-dense recurrent weights (matmul operands in compute_dtype) ----
    w_ode_rz = jnp.zeros((HP, 2 * HP), cdt)
    w_ode_rz = w_ode_rz.at[:hs, 0:hs].set(params["ode_w_hr"].T.astype(cdt))
    w_ode_rz = w_ode_rz.at[:hs, HP:HP + hs].set(params["ode_w_hz"].T.astype(cdt))
    w_ode_u = jnp.zeros((HP, HP), cdt)
    w_ode_u = w_ode_u.at[:hs, :hs].set(params["ode_w_hh"].T.astype(cdt))

    W_hh = params["gru_w_hh"]                                                        # (3*hs, hs)
    w_hh_t = jnp.zeros((HP, 3 * HP), cdt)
    for g in range(3):
        w_hh_t = w_hh_t.at[:hs, g * HP:g * HP + hs].set(W_hh[g * hs:(g + 1) * hs].T.astype(cdt))
    b_hn = jnp.zeros((1, HP), f32).at[0, :hs].set(params["gru_b_hh"][2 * hs:3 * hs].astype(f32))

    # ---- explicit VMEM budget (decisive on v7x's 64 MiB) ----
    w_bytes = sum(int(a.size) * a.dtype.itemsize for a in (w_ode_rz, w_ode_u, w_hh_t, b_hn))
    chunk_bytes = TT * BP * (3 * HP * 4 + HP * jnp.dtype(out_dtype).itemsize)
    vmem_limit = int(min(max(2 * (2 * w_bytes + 2 * chunk_bytes + BP * HP * 4) + (2 << 20),
                             32 << 20), 64 << 20))

    kernel = functools.partial(_mid_ode_kernel, TT, HP, float(delta_t))

    def _call(single_buffer_consts):
        ck = {"pipeline_mode": pl.Buffered(1)} if single_buffer_consts else {}
        const = lambda shape: pl.BlockSpec(shape, lambda c, s: (0,) * len(shape), **ck)
        return pl.pallas_call(
            kernel,
            out_shape=jax.ShapeDtypeStruct((TP, BP, HP), out_dtype),
            grid_spec=pltpu.PrefetchScalarGridSpec(
                num_scalar_prefetch=1,
                grid=(n_chunks,),
                in_specs=[
                    pl.BlockSpec((TT, BP, 3 * HP), lambda c, s: (c, 0, 0)),   # gi time-chunk
                    const(w_ode_rz.shape),
                    const(w_ode_u.shape),
                    const(w_hh_t.shape),
                    const(b_hn.shape),
                ],
                out_specs=pl.BlockSpec((TT, BP, HP), lambda c, s: (c, 0, 0)),
                scratch_shapes=[pltpu.VMEM((BP, HP), jnp.float32)],           # carried hidden state
            ),
            compiler_params=pltpu.CompilerParams(
                dimension_semantics=("arbitrary",),      # h carried across time chunks
                vmem_limit_bytes=vmem_limit,
            ),
        )(steps, gi_p, w_ode_rz, w_ode_u, w_hh_t, b_hn)

    try:
        out_p = jax.block_until_ready(_call(single_buffer_consts=True))
    except Exception:
        # pipeline_mode=pl.Buffered(1) unsupported on this jax build -> default double buffering.
        out_p = jax.block_until_ready(_call(single_buffer_consts=False))

    out = jnp.transpose(out_p[:T], (1, 0, 2))[:B, :, :hs]                    # (B, T, hidden)
    return out.astype(H.dtype)


def init_params(key, input_size, hidden_size, dtype=jnp.float32):
    ks = jax.random.split(key, 7)
    s = 0.3
    hs = hidden_size
    return {
        "ode_w_hr": s * jax.random.normal(ks[0], (hs, hs), dtype),
        "ode_w_hz": s * jax.random.normal(ks[1], (hs, hs), dtype),
        "ode_w_hh": s * jax.random.normal(ks[2], (hs, hs), dtype),
        "gru_w_ih": s * jax.random.normal(ks[3], (3 * hs, input_size), dtype),
        "gru_w_hh": s * jax.random.normal(ks[4], (3 * hs, hs), dtype),
        "gru_b_ih": 0.1 * jax.random.normal(ks[5], (3 * hs,), dtype),
        "gru_b_hh": 0.1 * jax.random.normal(ks[6], (3 * hs,), dtype),
    }


def mid_ode_reference(H, times, params, hidden_size, delta_t):
    """Plain-JAX replica of Mid_ODENetwork.forward (solver='euler')."""
    B, T, D = H.shape
    hs = hidden_size
    w_hr, w_hz, w_hh = params["ode_w_hr"], params["ode_w_hz"], params["ode_w_hh"]
    W_ih, W_hh = params["gru_w_ih"], params["gru_w_hh"]
    b_ih, b_hh = params["gru_b_ih"], params["gru_b_hh"]

    def sig(v):
        return 1.0 / (1.0 + jnp.exp(-v))

    h = jnp.zeros((B, hs), jnp.float32)
    t_host = np.asarray(times, dtype=np.float64)
    current = float(t_host[0, 0]) - 1.0
    outs = []
    for idx in range(T):
        obs = float(t_host[0, idx])
        while current < obs - 0.001 * delta_t:
            r = sig(h @ w_hr.T)
            z = sig(h @ w_hz.T)
            u = jnp.tanh((r * h) @ w_hh.T)
            h = h + delta_t * (1.0 - z) * (u - h)
            current += delta_t
        x = H[:, idx, :]
        gi = x @ W_ih.T + b_ih
        gh = h @ W_hh.T + b_hh
        r = sig(gi[:, :hs] + gh[:, :hs])
        z = sig(gi[:, hs:2 * hs] + gh[:, hs:2 * hs])
        n = jnp.tanh(gi[:, 2 * hs:] + r * gh[:, 2 * hs:])
        h = (1.0 - z) * n + z * h
        outs.append(h)
    return jnp.stack(outs, axis=1)


if __name__ == "__main__":
    B, T = 8, 8
    hidden_size = 32          # == gru_input_size (required by the module's reshape)
    delta_t = 1.0

    key = jax.random.PRNGKey(0)
    kH, kp = jax.random.split(key)
    H = 0.5 * jax.random.normal(kH, (B, T, hidden_size), jnp.float32)
    # Irregular observation times -> variable number of Euler steps per observation.
    times_row = jnp.array([1., 2., 4., 5., 7., 8., 10., 11.], jnp.float32)
    times = jnp.tile(times_row[None, :], (B, 1))
    params = init_params(kp, hidden_size, hidden_size)

    ref = mid_ode_reference(H, times, params, hidden_size, delta_t)

    # f32 matmul operands — strict-ish check.
    out_f32 = mid_ode_forward(H, times, params, hidden_size=hidden_size,
                              delta_t=delta_t, compute_dtype=jnp.float32)
    out_f32 = jax.block_until_ready(out_f32)
    assert out_f32.shape == (B, T, hidden_size)
    assert jnp.allclose(out_f32, ref, atol=2e-2, rtol=2e-2), \
        float(jnp.max(jnp.abs(out_f32 - ref)))

    # bf16 matmul operands (default; full-rate MXU on v5e/v6e/v7x), f32 state — loose check.
    out_bf16 = mid_ode_forward(H, times, params, hidden_size=hidden_size, delta_t=delta_t)
    out_bf16 = jax.block_until_ready(out_bf16)
    assert out_bf16.shape == (B, T, hidden_size)
    assert float(jnp.max(jnp.abs(out_bf16 - ref))) < 0.15

    print("KERNEL_OK")
</pallas_src>

<mosaic_0001>
module attributes {stable_mosaic.version = 11 : i64} {
  func.func @_mid_ode_kernel(%arg0: i32, %arg1: memref<8xi32, #tpu.memory_space<smem>>, %arg2: memref<8x8x384xf32, #tpu.memory_space<vmem>>, %arg3: memref<128x256xf32, #tpu.memory_space<vmem>>, %arg4: memref<128x128xf32, #tpu.memory_space<vmem>>, %arg5: memref<128x384xf32, #tpu.memory_space<vmem>>, %arg6: memref<1x128xf32, #tpu.memory_space<vmem>>, %arg7: memref<8x8x128xf32, #tpu.memory_space<vmem>>, %arg8: memref<8x128xf32, #tpu.memory_space<vmem>>) attributes {dimension_semantics = [#tpu.dimension_semantics<arbitrary>], iteration_bounds = array<i64: 1>, scalar_prefetch = 1 : i64, scratch_operands = 1 : i64, tpu.core_type = #tpu.core_type<tc>, window_params = [{transform_indices = @transform_0, window_bounds = array<i64: 8, 8, 384>}, {pipeline_mode = #tpu.pipeline_mode<synchronous>, transform_indices = @transform_1, window_bounds = array<i64: 128, 256>}, {pipeline_mode = #tpu.pipeline_mode<synchronous>, transform_indices = @transform_2, window_bounds = array<i64: 128, 128>}, {pipeline_mode = #tpu.pipeline_mode<synchronous>, transform_indices = @transform_3, window_bounds = array<i64: 128, 384>}, {pipeline_mode = #tpu.pipeline_mode<synchronous>, transform_indices = @transform_4, window_bounds = array<i64: 1, 128>}, {transform_indices = @transform_5, window_bounds = array<i64: 8, 8, 128>}]} {
    %c0_i32 = arith.constant 0 : i32
    %0 = arith.cmpi eq, %arg0, %c0_i32 : i32
    %1 = arith.extui %0 : i1 to i32
    %c0_i32_0 = arith.constant 0 : i32
    %2 = arith.cmpi ne, %1, %c0_i32_0 : i32
    scf.if %2 {
      %cst = arith.constant 0.000000e+00 : f32
      %7 = vector.broadcast %cst : f32 to vector<8x128xf32>
      %c0_6 = arith.constant 0 : index
      %c0_7 = arith.constant 0 : index
      %8 = vector.load %arg8[%c0_6, %c0_7] : memref<8x128xf32, #tpu.memory_space<vmem>>, vector<8x128xf32>
      tpu.vector_store %arg8[%c0_6, %c0_7], %7 {strides = array<i32>} : memref<8x128xf32, #tpu.memory_space<vmem>>, vector<8x128xf32>,
    } else {
    }
    %c0 = arith.constant 0 : index
    %c0_1 = arith.constant 0 : index
    %3 = vector.load %arg8[%c0, %c0_1] : memref<8x128xf32, #tpu.memory_space<vmem>>, vector<8x128xf32>
    %c0_i32_2 = arith.constant 0 : i32
    %c8_i32 = arith.constant 8 : i32
    %4 = arith.addi %c0_i32_2, %c8_i32 : i32
    %c1_i32 = arith.constant 1 : i32
    %5 = scf.for %arg9 = %c0_i32_2 to %4 step %c1_i32 iter_args(%arg10 = %3) -> (vector<8x128xf32>)  : i32 {
      %c8_i32_6 = arith.constant 8 : i32
      %7 = arith.muli %arg0, %c8_i32_6 : i32
      %8 = arith.addi %7, %arg9 : i32
      %9 = arith.index_cast %8 : i32 to index
      %10 = memref.load %arg1[%9] : memref<8xi32, #tpu.memory_space<smem>>
      %c0_i32_7 = arith.constant 0 : i32
      %11 = arith.subi %10, %c0_i32_7 : i32
      %12 = arith.addi %c0_i32_7, %11 : i32
      %c1_i32_8 = arith.constant 1 : i32
      %13 = scf.for %arg11 = %c0_i32_7 to %12 step %c1_i32_8 iter_args(%arg12 = %arg10) -> (vector<8x128xf32>)  : i32 {
        %c0_24 = arith.constant 0 : index
        %c0_25 = arith.constant 0 : index
        %56 = vector.load %arg3[%c0_24, %c0_25] : memref<128x256xf32, #tpu.memory_space<vmem>>, vector<128x256xf32>
        %cst_26 = arith.constant dense<0.000000e+00> : vector<8x256xf32>
        %57 = tpu.matmul %arg12, %56, %cst_26 {dimension_numbers = #tpu.dot_dimension_numbers<[1], [0], [0], [1], [0, 0, 1, 1], [], []>} : vector<8x128xf32>, vector<128x256xf32>, vector<8x256xf32> -> vector<8x256xf32>
        %58 = vector.extract_strided_slice %57 {offsets = [0, 0], sizes = [8, 128], strides = [1, 1]} : vector<8x256xf32> to vector<8x128xf32>
        %cst_27 = arith.constant 5.000000e-01 : f32
        %59 = vector.broadcast %cst_27 : f32 to vector<8x128xf32>
        %60 = arith.mulf %59, %58 : vector<8x128xf32>
        %61 = math.tanh %60 : vector<8x128xf32>
        %cst_28 = arith.constant 1.000000e+00 : f32
        %62 = vector.broadcast %cst_28 : f32 to vector<8x128xf32>
        %63 = arith.addf %61, %62 : vector<8x128xf32>
        %cst_29 = arith.constant 5.000000e-01 : f32
        %64 = vector.broadcast %cst_29 : f32 to vector<8x128xf32>
        %65 = arith.mulf %64, %63 : vector<8x128xf32>
        %66 = vector.extract_strided_slice %57 {offsets = [0, 128], sizes = [8, 128], strides = [1, 1]} : vector<8x256xf32> to vector<8x128xf32>
        %cst_30 = arith.constant 5.000000e-01 : f32
        %67 = vector.broadcast %cst_30 : f32 to vector<8x128xf32>
        %68 = arith.mulf %67, %66 : vector<8x128xf32>
        %69 = math.tanh %68 : vector<8x128xf32>
        %cst_31 = arith.constant 1.000000e+00 : f32
        %70 = vector.broadcast %cst_31 : f32 to vector<8x128xf32>
        %71 = arith.addf %69, %70 : vector<8x128xf32>
        %cst_32 = arith.constant 5.000000e-01 : f32
        %72 = vector.broadcast %cst_32 : f32 to vector<8x128xf32>
        %73 = arith.mulf %72, %71 : vector<8x128xf32>
        %74 = arith.mulf %65, %arg12 : vector<8x128xf32>
        %c0_33 = arith.constant 0 : index
        %c0_34 = arith.constant 0 : index
        %75 = vector.load %arg4[%c0_33, %c0_34] : memref<128x128xf32, #tpu.memory_space<vmem>>, vector<128x128xf32>
        %cst_35 = arith.constant dense<0.000000e+00> : vector<8x128xf32>
        %76 = tpu.matmul %74, %75, %cst_35 {dimension_numbers = #tpu.dot_dimension_numbers<[1], [0], [0], [1], [0, 0, 1, 1], [], []>} : vector<8x128xf32>, vector<128x128xf32>, vector<8x128xf32> -> vector<8x128xf32>
        %77 = math.tanh %76 : vector<8x128xf32>
        %cst_36 = arith.constant 1.000000e+00 : f32
        %78 = vector.broadcast %cst_36 : f32 to vector<8x128xf32>
        %79 = arith.subf %78, %73 : vector<8x128xf32>
        %cst_37 = arith.constant 1.000000e+00 : f32
        %80 = vector.broadcast %cst_37 : f32 to vector<8x128xf32>
        %81 = arith.mulf %80, %79 : vector<8x128xf32>
        %82 = arith.subf %77, %arg12 : vector<8x128xf32>
        %83 = arith.mulf %81, %82 : vector<8x128xf32>
        %84 = arith.addf %arg12, %83 : vector<8x128xf32>
        scf.yield %84 : vector<8x128xf32>
      }
      %14 = arith.index_cast %arg9 : i32 to index
      %c0_9 = arith.constant 0 : index
      %c0_10 = arith.constant 0 : index
      %15 = vector.load %arg2[%14, %c0_9, %c0_10] : memref<8x8x384xf32, #tpu.memory_space<vmem>>, vector<1x8x384xf32>
      %16 = vector.shape_cast %15 : vector<1x8x384xf32> to vector<8x384xf32>
      %c0_11 = arith.constant 0 : index
      %c0_12 = arith.constant 0 : index
      %17 = vector.load %arg5[%c0_11, %c0_12] : memref<128x384xf32, #tpu.memory_space<vmem>>, vector<128x384xf32>
      %cst = arith.constant dense<0.000000e+00> : vector<8x384xf32>
      %18 = tpu.matmul %13, %17, %cst {dimension_numbers = #tpu.dot_dimension_numbers<[1], [0], [0], [1], [0, 0, 1, 1], [], []>} : vector<8x128xf32>, vector<128x384xf32>, vector<8x384xf32> -> vector<8x384xf32>
      %19 = vector.extract_strided_slice %16 {offsets = [0, 0], sizes = [8, 128], strides = [1, 1]} : vector<8x384xf32> to vector<8x128xf32>
      %20 = vector.extract_strided_slice %18 {offsets = [0, 0], sizes = [8, 128], strides = [1, 1]} : vector<8x384xf32> to vector<8x128xf32>
      %21 = arith.addf %19, %20 : vector<8x128xf32>
      %cst_13 = arith.constant 5.000000e-01 : f32
      %22 = vector.broadcast %cst_13 : f32 to vector<8x128xf32>
      %23 = arith.mulf %22, %21 : vector<8x128xf32>
      %24 = math.tanh %23 : vector<8x128xf32>
      %cst_14 = arith.constant 1.000000e+00 : f32
      %25 = vector.broadcast %cst_14 : f32 to vector<8x128xf32>
      %26 = arith.addf %24, %25 : vector<8x128xf32>
      %cst_15 = arith.constant 5.000000e-01 : f32
      %27 = vector.broadcast %cst_15 : f32 to vector<8x128xf32>
      %28 = arith.mulf %27, %26 : vector<8x128xf32>
      %29 = vector.extract_strided_slice %16 {offsets = [0, 128], sizes = [8, 128], strides = [1, 1]} : vector<8x384xf32> to vector<8x128xf32>
      %30 = vector.extract_strided_slice %18 {offsets = [0, 128], sizes = [8, 128], strides = [1, 1]} : vector<8x384xf32> to vector<8x128xf32>
      %31 = arith.addf %29, %30 : vector<8x128xf32>
      %cst_16 = arith.constant 5.000000e-01 : f32
      %32 = vector.broadcast %cst_16 : f32 to vector<8x128xf32>
      %33 = arith.mulf %32, %31 : vector<8x128xf32>
      %34 = math.tanh %33 : vector<8x128xf32>
      %cst_17 = arith.constant 1.000000e+00 : f32
      %35 = vector.broadcast %cst_17 : f32 to vector<8x128xf32>
      %36 = arith.addf %34, %35 : vector<8x128xf32>
      %cst_18 = arith.constant 5.000000e-01 : f32
      %37 = vector.broadcast %cst_18 : f32 to vector<8x128xf32>
      %38 = arith.mulf %37, %36 : vector<8x128xf32>
      %39 = vector.extract_strided_slice %16 {offsets = [0, 256], sizes = [8, 128], strides = [1, 1]} : vector<8x384xf32> to vector<8x128xf32>
      %40 = vector.extract_strided_slice %18 {offsets = [0, 256], sizes = [8, 128], strides = [1, 1]} : vector<8x384xf32> to vector<8x128xf32>
      %c0_19 = arith.constant 0 : index
      %c0_20 = arith.constant 0 : index
      %41 = vector.load %arg6[%c0_19, %c0_20] : memref<1x128xf32, #tpu.memory_space<vmem>>, vector<1x128xf32>
      %42 = vector.broadcast %41 : vector<1x128xf32> to vector<8x128xf32>
      %43 = arith.addf %40, %42 : vector<8x128xf32>
      %44 = arith.mulf %28, %43 : vector<8x128xf32>
      %45 = arith.addf %39, %44 : vector<8x128xf32>
      %46 = math.tanh %45 : vector<8x128xf32>
      %cst_21 = arith.constant 1.000000e+00 : f32
      %47 = vector.broadcast %cst_21 : f32 to vector<8x128xf32>
      %48 = arith.subf %47, %38 : vector<8x128xf32>
      %49 = arith.mulf %48, %46 : vector<8x128xf32>
      %50 = arith.mulf %38, %13 : vector<8x128xf32>
      %51 = arith.addf %49, %50 : vector<8x128xf32>
      %52 = arith.index_cast %arg9 : i32 to index
      %c0_22 = arith.constant 0 : index
      %c0_23 = arith.constant 0 : index
      %53 = vector.load %arg7[%52, %c0_22, %c0_23] : memref<8x8x128xf32, #tpu.memory_space<vmem>>, vector<1x8x128xf32>
      %54 = vector.shape_cast %53 : vector<1x8x128xf32> to vector<8x128xf32>
      %55 = vector.shape_cast %51 : vector<8x128xf32> to vector<1x8x128xf32>
      tpu.vector_store %arg7[%52, %c0_22, %c0_23], %55 {strides = array<i32>} : memref<8x8x128xf32, #tpu.memory_space<vmem>>, vector<1x8x128xf32>,
      scf.yield %51 : vector<8x128xf32>
    }
    %c8_i32_3 = arith.constant 8 : i32
    %c0_4 = arith.constant 0 : index
    %c0_5 = arith.constant 0 : index
    %6 = vector.load %arg8[%c0_4, %c0_5] : memref<8x128xf32, #tpu.memory_space<vmem>>, vector<8x128xf32>
    tpu.vector_store %arg8[%c0_4, %c0_5], %5 {strides = array<i32>} : memref<8x128xf32, #tpu.memory_space<vmem>>, vector<8x128xf32>,
    return
  }
  func.func @transform_0(%arg0: i32, %arg1: memref<8xi32, #tpu.memory_space<smem>>) -> (i32, i32, i32) {
    %c0_i32 = arith.constant 0 : i32
    %c0_i32_0 = arith.constant 0 : i32
    %c0_i32_1 = arith.constant 0 : i32
    return %arg0, %c0_i32, %c0_i32_0 : i32, i32, i32
  }
  func.func @transform_1(%arg0: i32, %arg1: memref<8xi32, #tpu.memory_space<smem>>) -> (i32, i32) {
    %c0_i32 = arith.constant 0 : i32
    %c0_i32_0 = arith.constant 0 : i32
    %c0_i32_1 = arith.constant 0 : i32
    return %c0_i32, %c0_i32_0 : i32, i32
  }
  func.func @transform_2(%arg0: i32, %arg1: memref<8xi32, #tpu.memory_space<smem>>) -> (i32, i32) {
    %c0_i32 = arith.constant 0 : i32
    %c0_i32_0 = arith.constant 0 : i32
    %c0_i32_1 = arith.constant 0 : i32
    return %c0_i32, %c0_i32_0 : i32, i32
  }
  func.func @transform_3(%arg0: i32, %arg1: memref<8xi32, #tpu.memory_space<smem>>) -> (i32, i32) {
    %c0_i32 = arith.constant 0 : i32
    %c0_i32_0 = arith.constant 0 : i32
    %c0_i32_1 = arith.constant 0 : i32
    return %c0_i32, %c0_i32_0 : i32, i32
  }
  func.func @transform_4(%arg0: i32, %arg1: memref<8xi32, #tpu.memory_space<smem>>) -> (i32, i32) {
    %c0_i32 = arith.constant 0 : i32
    %c0_i32_0 = arith.constant 0 : i32
    %c0_i32_1 = arith.constant 0 : i32
    return %c0_i32, %c0_i32_0 : i32, i32
  }
  func.func @transform_5(%arg0: i32, %arg1: memref<8xi32, #tpu.memory_space<smem>>) -> (i32, i32, i32) {
    %c0_i32 = arith.constant 0 : i32
    %c0_i32_0 = arith.constant 0 : i32
    %c0_i32_1 = arith.constant 0 : i32
    return %arg0, %c0_i32, %c0_i32_0 : i32, i32, i32
  }
}

module attributes {stable_mosaic.version = 11 : i64} {
  func.func @_mid_ode_kernel(%arg0: i32, %arg1: memref<8xi32, #tpu.memory_space<smem>>, %arg2: memref<8x8x384xf32, #tpu.memory_space<vmem>>, %arg3: memref<128x256xf32, #tpu.memory_space<vmem>>, %arg4: memref<128x128xf32, #tpu.memory_space<vmem>>, %arg5: memref<128x384xf32, #tpu.memory_space<vmem>>, %arg6: memref<1x128xf32, #tpu.memory_space<vmem>>, %arg7: memref<8x8x128xf32, #tpu.memory_space<vmem>>, %arg8: memref<8x128xf32, #tpu.memory_space<vmem>>) attributes {dimension_semantics = [#tpu.dimension_semantics<arbitrary>], iteration_bounds = array<i64: 1>, scalar_prefetch = 1 : i64, scratch_operands = 1 : i64, tpu.core_type = #tpu.core_type<tc>, window_params = [{transform_indices = @transform_0, window_bounds = array<i64: 8, 8, 384>}, {pipeline_mode = #tpu.pipeline_mode<synchronous>, transform_indices = @transform_1, window_bounds = array<i64: 128, 256>}, {pipeline_mode = #tpu.pipeline_mode<synchronous>, transform_indices = @transform_2, window_bounds = array<i64: 128, 128>}, {pipeline_mode = #tpu.pipeline_mode<synchronous>, transform_indices = @transform_3, window_bounds = array<i64: 128, 384>}, {pipeline_mode = #tpu.pipeline_mode<synchronous>, transform_indices = @transform_4, window_bounds = array<i64: 1, 128>}, {transform_indices = @transform_5, window_bounds = array<i64: 8, 8, 128>}]} {
    %c0_i32 = arith.constant 0 : i32
    %0 = arith.cmpi eq, %arg0, %c0_i32 : i32
    %1 = arith.extui %0 : i1 to i32
    %c0_i32_0 = arith.constant 0 : i32
    %2 = arith.cmpi ne, %1, %c0_i32_0 : i32
    scf.if %2 {
      %cst = arith.constant 0.000000e+00 : f32
      %7 = vector.broadcast %cst : f32 to vector<8x128xf32>
      %c0_6 = arith.constant 0 : index
      %c0_7 = arith.constant 0 : index
      %8 = vector.load %arg8[%c0_6, %c0_7] : memref<8x128xf32, #tpu.memory_space<vmem>>, vector<8x128xf32>
      tpu.vector_store %arg8[%c0_6, %c0_7], %7 {strides = array<i32>} : memref<8x128xf32, #tpu.memory_space<vmem>>, vector<8x128xf32>,
    } else {
    }
    %c0 = arith.constant 0 : index
    %c0_1 = arith.constant 0 : index
    %3 = vector.load %arg8[%c0, %c0_1] : memref<8x128xf32, #tpu.memory_space<vmem>>, vector<8x128xf32>
    %c0_i32_2 = arith.constant 0 : i32
    %c8_i32 = arith.constant 8 : i32
    %4 = arith.addi %c0_i32_2, %c8_i32 : i32
    %c1_i32 = arith.constant 1 : i32
    %5 = scf.for %arg9 = %c0_i32_2 to %4 step %c1_i32 iter_args(%arg10 = %3) -> (vector<8x128xf32>)  : i32 {
      %c8_i32_6 = arith.constant 8 : i32
      %7 = arith.muli %arg0, %c8_i32_6 : i32
      %8 = arith.addi %7, %arg9 : i32
      %9 = arith.index_cast %8 : i32 to index
      %10 = memref.load %arg1[%9] : memref<8xi32, #tpu.memory_space<smem>>
      %c0_i32_7 = arith.constant 0 : i32
      %11 = arith.subi %10, %c0_i32_7 : i32
      %12 = arith.addi %c0_i32_7, %11 : i32
      %c1_i32_8 = arith.constant 1 : i32
      %13 = scf.for %arg11 = %c0_i32_7 to %12 step %c1_i32_8 iter_args(%arg12 = %arg10) -> (vector<8x128xf32>)  : i32 {
        %c0_24 = arith.constant 0 : index
        %c0_25 = arith.constant 0 : index
        %56 = vector.load %arg3[%c0_24, %c0_25] : memref<128x256xf32, #tpu.memory_space<vmem>>, vector<128x256xf32>
        %cst_26 = arith.constant dense<0.000000e+00> : vector<8x256xf32>
        %57 = tpu.matmul %arg12, %56, %cst_26 {dimension_numbers = #tpu.dot_dimension_numbers<[1], [0], [0], [1], [0, 0, 1, 1], [], []>} : vector<8x128xf32>, vector<128x256xf32>, vector<8x256xf32> -> vector<8x256xf32>
        %58 = vector.extract_strided_slice %57 {offsets = [0, 0], sizes = [8, 128], strides = [1, 1]} : vector<8x256xf32> to vector<8x128xf32>
        %cst_27 = arith.constant 5.000000e-01 : f32
        %59 = vector.broadcast %cst_27 : f32 to vector<8x128xf32>
        %60 = arith.mulf %59, %58 : vector<8x128xf32>
        %61 = math.tanh %60 : vector<8x128xf32>
        %cst_28 = arith.constant 1.000000e+00 : f32
        %62 = vector.broadcast %cst_28 : f32 to vector<8x128xf32>
        %63 = arith.addf %61, %62 : vector<8x128xf32>
        %cst_29 = arith.constant 5.000000e-01 : f32
        %64 = vector.broadcast %cst_29 : f32 to vector<8x128xf32>
        %65 = arith.mulf %64, %63 : vector<8x128xf32>
        %66 = vector.extract_strided_slice %57 {offsets = [0, 128], sizes = [8, 128], strides = [1, 1]} : vector<8x256xf32> to vector<8x128xf32>
        %cst_30 = arith.constant 5.000000e-01 : f32
        %67 = vector.broadcast %cst_30 : f32 to vector<8x128xf32>
        %68 = arith.mulf %67, %66 : vector<8x128xf32>
        %69 = math.tanh %68 : vector<8x128xf32>
        %cst_31 = arith.constant 1.000000e+00 : f32
        %70 = vector.broadcast %cst_31 : f32 to vector<8x128xf32>
        %71 = arith.addf %69, %70 : vector<8x128xf32>
        %cst_32 = arith.constant 5.000000e-01 : f32
        %72 = vector.broadcast %cst_32 : f32 to vector<8x128xf32>
        %73 = arith.mulf %72, %71 : vector<8x128xf32>
        %74 = arith.mulf %65, %arg12 : vector<8x128xf32>
        %c0_33 = arith.constant 0 : index
        %c0_34 = arith.constant 0 : index
        %75 = vector.load %arg4[%c0_33, %c0_34] : memref<128x128xf32, #tpu.memory_space<vmem>>, vector<128x128xf32>
        %cst_35 = arith.constant dense<0.000000e+00> : vector<8x128xf32>
        %76 = tpu.matmul %74, %75, %cst_35 {dimension_numbers = #tpu.dot_dimension_numbers<[1], [0], [0], [1], [0, 0, 1, 1], [], []>} : vector<8x128xf32>, vector<128x128xf32>, vector<8x128xf32> -> vector<8x128xf32>
        %77 = math.tanh %76 : vector<8x128xf32>
        %cst_36 = arith.constant 1.000000e+00 : f32
        %78 = vector.broadcast %cst_36 : f32 to vector<8x128xf32>
        %79 = arith.subf %78, %73 : vector<8x128xf32>
        %cst_37 = arith.constant 1.000000e+00 : f32
        %80 = vector.broadcast %cst_37 : f32 to vector<8x128xf32>
        %81 = arith.mulf %80, %79 : vector<8x128xf32>
        %82 = arith.subf %77, %arg12 : vector<8x128xf32>
        %83 = arith.mulf %81, %82 : vector<8x128xf32>
        %84 = arith.addf %arg12, %83 : vector<8x128xf32>
        scf.yield %84 : vector<8x128xf32>
      }
      %14 = arith.index_cast %arg9 : i32 to index
      %c0_9 = arith.constant 0 : index
      %c0_10 = arith.constant 0 : index
      %15 = vector.load %arg2[%14, %c0_9, %c0_10] : memref<8x8x384xf32, #tpu.memory_space<vmem>>, vector<1x8x384xf32>
      %16 = vector.shape_cast %15 : vector<1x8x384xf32> to vector<8x384xf32>
      %c0_11 = arith.constant 0 : index
      %c0_12 = arith.constant 0 : index
      %17 = vector.load %arg5[%c0_11, %c0_12] : memref<128x384xf32, #tpu.memory_space<vmem>>, vector<128x384xf32>
      %cst = arith.constant dense<0.000000e+00> : vector<8x384xf32>
      %18 = tpu.matmul %13, %17, %cst {dimension_numbers = #tpu.dot_dimension_numbers<[1], [0], [0], [1], [0, 0, 1, 1], [], []>} : vector<8x128xf32>, vector<128x384xf32>, vector<8x384xf32> -> vector<8x384xf32>
      %19 = vector.extract_strided_slice %16 {offsets = [0, 0], sizes = [8, 128], strides = [1, 1]} : vector<8x384xf32> to vector<8x128xf32>
      %20 = vector.extract_strided_slice %18 {offsets = [0, 0], sizes = [8, 128], strides = [1, 1]} : vector<8x384xf32> to vector<8x128xf32>
      %21 = arith.addf %19, %20 : vector<8x128xf32>
      %cst_13 = arith.constant 5.000000e-01 : f32
      %22 = vector.broadcast %cst_13 : f32 to vector<8x128xf32>
      %23 = arith.mulf %22, %21 : vector<8x128xf32>
      %24 = math.tanh %23 : vector<8x128xf32>
      %cst_14 = arith.constant 1.000000e+00 : f32
      %25 = vector.broadcast %cst_14 : f32 to vector<8x128xf32>
      %26 = arith.addf %24, %25 : vector<8x128xf32>
      %cst_15 = arith.constant 5.000000e-01 : f32
      %27 = vector.broadcast %cst_15 : f32 to vector<8x128xf32>
      %28 = arith.mulf %27, %26 : vector<8x128xf32>
      %29 = vector.extract_strided_slice %16 {offsets = [0, 128], sizes = [8, 128], strides = [1, 1]} : vector<8x384xf32> to vector<8x128xf32>
      %30 = vector.extract_strided_slice %18 {offsets = [0, 128], sizes = [8, 128], strides = [1, 1]} : vector<8x384xf32> to vector<8x128xf32>
      %31 = arith.addf %29, %30 : vector<8x128xf32>
      %cst_16 = arith.constant 5.000000e-01 : f32
      %32 = vector.broadcast %cst_16 : f32 to vector<8x128xf32>
      %33 = arith.mulf %32, %31 : vector<8x128xf32>
      %34 = math.tanh %33 : vector<8x128xf32>
      %cst_17 = arith.constant 1.000000e+00 : f32
      %35 = vector.broadcast %cst_17 : f32 to vector<8x128xf32>
      %36 = arith.addf %34, %35 : vector<8x128xf32>
      %cst_18 = arith.constant 5.000000e-01 : f32
      %37 = vector.broadcast %cst_18 : f32 to vector<8x128xf32>
      %38 = arith.mulf %37, %36 : vector<8x128xf32>
      %39 = vector.extract_strided_slice %16 {offsets = [0, 256], sizes = [8, 128], strides = [1, 1]} : vector<8x384xf32> to vector<8x128xf32>
      %40 = vector.extract_strided_slice %18 {offsets = [0, 256], sizes = [8, 128], strides = [1, 1]} : vector<8x384xf32> to vector<8x128xf32>
      %c0_19 = arith.constant 0 : index
      %c0_20 = arith.constant 0 : index
      %41 = vector.load %arg6[%c0_19, %c0_20] : memref<1x128xf32, #tpu.memory_space<vmem>>, vector<1x128xf32>
      %42 = vector.broadcast %41 : vector<1x128xf32> to vector<8x128xf32>
      %43 = arith.addf %40, %42 : vector<8x128xf32>
      %44 = arith.mulf %28, %43 : vector<8x128xf32>
      %45 = arith.addf %39, %44 : vector<8x128xf32>
      %46 = math.tanh %45 : vector<8x128xf32>
      %cst_21 = arith.constant 1.000000e+00 : f32
      %47 = vector.broadcast %cst_21 : f32 to vector<8x128xf32>
      %48 = arith.subf %47, %38 : vector<8x128xf32>
      %49 = arith.mulf %48, %46 : vector<8x128xf32>
      %50 = arith.mulf %38, %13 : vector<8x128xf32>
      %51 = arith.addf %49, %50 : vector<8x128xf32>
      %52 = arith.index_cast %arg9 : i32 to index
      %c0_22 = arith.constant 0 : index
      %c0_23 = arith.constant 0 : index
      %53 = vector.load %arg7[%52, %c0_22, %c0_23] : memref<8x8x128xf32, #tpu.memory_space<vmem>>, vector<1x8x128xf32>
      %54 = vector.shape_cast %53 : vector<1x8x128xf32> to vector<8x128xf32>
      %55 = vector.shape_cast %51 : vector<8x128xf32> to vector<1x8x128xf32>
      tpu.vector_store %arg7[%52, %c0_22, %c0_23], %55 {strides = array<i32>} : memref<8x8x128xf32, #tpu.memory_space<vmem>>, vector<1x8x128xf32>,
      scf.yield %51 : vector<8x128xf32>
    }
    %c8_i32_3 = arith.constant 8 : i32
    %c0_4 = arith.constant 0 : index
    %c0_5 = arith.constant 0 : index
    %6 = vector.load %arg8[%c0_4, %c0_5] : memref<8x128xf32, #tpu.memory_space<vmem>>, vector<8x128xf32>
    tpu.vector_store %arg8[%c0_4, %c0_5], %5 {strides = array<i32>} : memref<8x128xf32, #tpu.memory_space<vmem>>, vector<8x128xf32>,
    return
  }
  func.func @transform_0(%arg0: i32, %arg1: memref<8xi32, #tpu.memory_space<smem>>) -> (i32, i32, i32) {
    %c0_i32 = arith.constant 0 : i32
    %c0_i32_0 = arith.constant 0 : i32
    %c0_i32_1 = arith.constant 0 : i32
    return %arg0, %c0_i32, %c0_i32_0 : i32, i32, i32
  }
  func.func @transform_1(%arg0: i32, %arg1: memref<8xi32, #tpu.memory_space<smem>>) -> (i32, i32) {
    %c0_i32 = arith.constant 0 : i32
    %c0_i32_0 = arith.constant 0 : i32
    %c0_i32_1 = arith.constant 0 : i32
    return %c0_i32, %c0_i32_0 : i32, i32
  }
  func.func @transform_2(%arg0: i32, %arg1: memref<8xi32, #tpu.memory_space<smem>>) -> (i32, i32) {
    %c0_i32 = arith.constant 0 : i32
    %c0_i32_0 = arith.constant 0 : i32
    %c0_i32_1 = arith.constant 0 : i32
    return %c0_i32, %c0_i32_0 : i32, i32
  }
  func.func @transform_3(%arg0: i32, %arg1: memref<8xi32, #tpu.memory_space<smem>>) -> (i32, i32) {
    %c0_i32 = arith.constant 0 : i32
    %c0_i32_0 = arith.constant 0 : i32
    %c0_i32_1 = arith.constant 0 : i32
    return %c0_i32, %c0_i32_0 : i32, i32
  }
  func.func @transform_4(%arg0: i32, %arg1: memref<8xi32, #tpu.memory_space<smem>>) -> (i32, i32) {
    %c0_i32 = arith.constant 0 : i32
    %c0_i32_0 = arith.constant 0 : i32
    %c0_i32_1 = arith.constant 0 : i32
    return %c0_i32, %c0_i32_0 : i32, i32
  }
  func.func @transform_5(%arg0: i32, %arg1: memref<8xi32, #tpu.memory_space<smem>>) -> (i32, i32, i32) {
    %c0_i32 = arith.constant 0 : i32
    %c0_i32_0 = arith.constant 0 : i32
    %c0_i32_1 = arith.constant 0 : i32
    return %arg0, %c0_i32, %c0_i32_0 : i32, i32, i32
  }
}

</mosaic_0001>

<llo_original>
// kernel: tpu_custom_call.1
$region0: #{tpu_custom_call.1}
  #allocation0 [shape = 'u32[]', space=smem, size = 0x4, offset = 0x4, fixed_abs, tag = 'smem constant byte address 0x4 - core index']
  #allocation1 [shape = 'u32[144,128]{1,0:T(1,128)}', space=vmem, size = 0x12000, scoped, tag = 'internal scratch']
  #allocation2 [shape = 'f32[8,128]{1,0:T(8,128)}', space=vmem, size = 0x1000, scoped, tag = 'scratch operand']
  #allocation3 [shape = 's32[1]{0}', space=sflag, size = 0x4, scoped, tag = 'scoped memory for tpu_custom_call.1']
  #allocation4 [shape = 'u8[512]{0}', space=smem, size = 0x200, scoped, tag = 'prefetched SMEM operand 0']
  %s0 = inlined_call_operand.hbm [shape: s32[8], index: 0, kind: input, shape index: {}]
  %s1 = inlined_call_operand.hbm [shape: f32[8,8,384], index: 1, kind: input, shape index: {}]
  %s2 = inlined_call_operand.hbm [shape: f32[128,256], index: 2, kind: input, shape index: {}]
  %s3 = inlined_call_operand.hbm [shape: f32[128,128], index: 3, kind: input, shape index: {}]
  %s4 = inlined_call_operand.hbm [shape: f32[128,384], index: 4, kind: input, shape index: {}]
  %s5 = inlined_call_operand.vmem [shape: f32[1,128], index: 5, kind: input, shape index: {}]
  %s6 = inlined_call_operand.hbm [shape: f32[8,8,128], index: 6, kind: output, shape index: {}]
  %s7 = sld [smem:[#allocation0]]
  $region64: #{tpu_custom_call.1} parent=0
    _
  %s9 = ssub.s32 1, %s7
  %s10 = scalar_select 0, %s9, %s7
  %12 = dma.hbm_to_smem %s0, 16, [#allocation4], [#allocation3]
  %13 = dma.done [#allocation3], 16
  %14 = sfence
  $region1: #{tpu_custom_call.1} parent=0
    #allocation5 [shape = 'u8[98304]{0}', space=vmem, size = 0x18000, scoped, tag = 'input window, operand 1, single buffered']
    #allocation6 [shape = 's32[1]{0}', space=sflag, size = 0x4, scoped, tag = 'scoped memory for tpu_custom_call.1']
    #allocation7 [shape = 's32[1]{0}', space=sflag, size = 0x4, scoped, tag = 'scoped memory for tpu_custom_call.1']
    #allocation8 [shape = 'u8[131072]{0}', space=vmem, size = 0x20000, scoped, tag = 'input window, operand 2, single buffered']
    #allocation9 [shape = 's32[1]{0}', space=sflag, size = 0x4, scoped, tag = 'scoped memory for tpu_custom_call.1']
    #allocation10 [shape = 'u8[65536]{0}', space=vmem, size = 0x10000, scoped, tag = 'input window, operand 3, single buffered']
    #allocation11 [shape = 'u8[196608]{0}', space=vmem, size = 0x30000, scoped, tag = 'input window, operand 4, single buffered']
    #allocation12 [shape = 's32[1]{0}', space=sflag, size = 0x4, scoped, tag = 'scoped memory for tpu_custom_call.1']
    #allocation13 [shape = 'u8[32768]{0}', space=vmem, size = 0x8000, scoped, tag = 'output window, operand 0, single buffered']
    %15 = vsyncpa [#allocation6], 0
    %16 = vsyncpa [#allocation9], 0
    %17 = vsyncpa [#allocation12], 0
    %18 = vsyncpa [#allocation7], 0
    // Predicated region
    $region2: #{tpu_custom_call.1} parent=1 // pred_check
      _
    $region3: #{tpu_custom_call.1} parent=1 // pred_check_branch
      %20 = sbr.rel (0) target = $region5
    $region4: #{tpu_custom_call.1} parent=1 // pred_region
      %s22 = ssub.s32 3072, 3072
      %23 = vsyncadd [#allocation6], %s22
      %s24 = sshll.u32 [#allocation5], 4
      %s25 = int_to_ptr.vmem [resolvable:$true] %s24
      %30 = dma.hbm_to_vmem [thread:$0]  %s1, 3072, %s25, [#allocation6], 384, 384, 24
    $region5: #{tpu_custom_call.1} parent=1 // pred_fallthru
      _
    // Predicated region
    $region6: #{tpu_custom_call.1} parent=1 // pred_check
      _
    $region7: #{tpu_custom_call.1} parent=1 // pred_check_branch
      %32 = sbr.rel (0) target = $region9
    $region8: #{tpu_custom_call.1} parent=1 // pred_region
      %s34 = ssub.s32 4096, 4096
      %35 = vsyncadd [#allocation9], %s34
      %s36 = sshll.u32 [#allocation8], 4
      %s37 = int_to_ptr.vmem [resolvable:$true] %s36
      %42 = dma.hbm_to_vmem [thread:$0]  %s2, 4096, %s37, [#allocation9], 256, 256, 16
    $region9: #{tpu_custom_call.1} parent=1 // pred_fallthru
      _
    // Predicated region
    $region10: #{tpu_custom_call.1} parent=1 // pred_check
      _
    $region11: #{tpu_custom_call.1} parent=1 // pred_check_branch
      %44 = sbr.rel (0) target = $region13
    $region12: #{tpu_custom_call.1} parent=1 // pred_region
      %s46 = ssub.s32 2048, 2048
      %47 = vsyncadd [#allocation9], %s46
      %s48 = sshll.u32 [#allocation10], 4
      %s49 = int_to_ptr.vmem [resolvable:$true] %s48
      %54 = dma.hbm_to_vmem [thread:$0]  %s3, 2048, %s49, [#allocation9], 128, 128, 8
    $region13: #{tpu_custom_call.1} parent=1 // pred_fallthru
      _
    // Predicated region
    $region14: #{tpu_custom_call.1} parent=1 // pred_check
      _
    $region15: #{tpu_custom_call.1} parent=1 // pred_check_branch
      %56 = sbr.rel (0) target = $region17
    $region16: #{tpu_custom_call.1} parent=1 // pred_region
      %s58 = ssub.s32 6144, 6144
      %59 = vsyncadd [#allocation12], %s58
      %s60 = sshll.u32 [#allocation11], 4
      %s61 = int_to_ptr.vmem [resolvable:$true] %s60
      %66 = dma.hbm_to_vmem [thread:$0]  %s4, 6144, %s61, [#allocation12], 384, 384, 24
    $region17: #{tpu_custom_call.1} parent=1 // pred_fallthru
      _
    // Predicated region
    $region18: #{tpu_custom_call.1} parent=1 // pred_check
      _
    $region19: #{tpu_custom_call.1} parent=1 // pred_check_branch
      %68 = sbr.rel (0) target = $region21
    $region20: #{tpu_custom_call.1} parent=1 // pred_region
      _
    $region21: #{tpu_custom_call.1} parent=1 // pred_fallthru
      _
    // Predicated region
    $region22: #{tpu_custom_call.1} parent=1 // pred_check
      _
    $region23: #{tpu_custom_call.1} parent=1 // pred_check_branch
      %70 = sbr.rel (0) target = $region25
    $region24: #{tpu_custom_call.1} parent=1 // pred_region
      %71 = dma.done [#allocation6], 3072
    $region25: #{tpu_custom_call.1} parent=1 // pred_fallthru
      _
    // Predicated region
    $region26: #{tpu_custom_call.1} parent=1 // pred_check
      _
    $region27: #{tpu_custom_call.1} parent=1 // pred_check_branch
      %73 = sbr.rel (0) target = $region29
    $region28: #{tpu_custom_call.1} parent=1 // pred_region
      %74 = dma.done [#allocation9], 4096
    $region29: #{tpu_custom_call.1} parent=1 // pred_fallthru
      _
    // Predicated region
    $region30: #{tpu_custom_call.1} parent=1 // pred_check
      _
    $region31: #{tpu_custom_call.1} parent=1 // pred_check_branch
      %76 = sbr.rel (0) target = $region33
    $region32: #{tpu_custom_call.1} parent=1 // pred_region
      %77 = dma.done [#allocation9], 2048
    $region33: #{tpu_custom_call.1} parent=1 // pred_fallthru
      _
    // Predicated region
    $region34: #{tpu_custom_call.1} parent=1 // pred_check
      _
    $region35: #{tpu_custom_call.1} parent=1 // pred_check_branch
      %79 = sbr.rel (0) target = $region37
    $region36: #{tpu_custom_call.1} parent=1 // pred_region
      %80 = dma.done [#allocation12], 6144
    $region37: #{tpu_custom_call.1} parent=1 // pred_fallthru
      _
    %p81 = scmp.eq.s32.totalorder 0, 0
    // Predicated region
    $region38: #{tpu_custom_call.1} parent=1 // pred_check
      %p82 = pneg %p81
    $region39: #{tpu_custom_call.1} parent=1 // pred_check_branch
      %84 = sbr.rel (%p82) target = $region41
    $region40: #{tpu_custom_call.1} parent=1 // pred_region
      %85 = vst [vmem:[#allocation2] sm:$0xff] 0.0
    $region41: #{tpu_custom_call.1} parent=1 // pred_fallthru
      _
    %v86 = vld [vmem:[#allocation2] sm:$0xff]
    loop: start=0, step=1, limit=8
    $region42: #{tpu_custom_call.1} parent=1 // loop_pre_header
      _
    $region43: #{tpu_custom_call.1} parent=1 // loop_header
      %s88 = sphi 0, %s92
      %p89 = scmp.ge.s32.totalorder %s88, 8
      %v93 = vphi %v86, %v526
    $region44: #{tpu_custom_call.1} parent=1 // loop_header_branch
      %91 = sbr.rel (%p89) target = $region48
    $region45: #{tpu_custom_call.1} parent=1 // loop_body
      %s94 = smul.u32 0, 8
      %s95 = sadd.s32 %s94, %s88
      %s96 = sld [smem:[#allocation4 + %s95]]
      // While loop
      $region49: #{tpu_custom_call.1} parent=45 // loop_pre_header
        _
      $region50: #{tpu_custom_call.1} parent=45 // loop_header
        %s98 = sphi 0, %s100
        %p99 = scmp.ge.s32.totalorder %s98, %s96
        %v103 = vphi %v93, %v306
      $region51: #{tpu_custom_call.1} parent=45 // loop_header_branch
        %102 = sbr.rel (%p99) target = $region55
      $region52: #{tpu_custom_call.1} parent=45 // loop_body
        %v104 = vld [vmem:[#allocation8] sm:$0xff]
        %v105 = vld [vmem:[#allocation8 + $0x8] sm:$0xff]
        %v106 = vld [vmem:[#allocation8 + $0x10] sm:$0xff]
        %v107 = vld [vmem:[#allocation8 + $0x18] sm:$0xff]
        %v108 = vld [vmem:[#allocation8 + $0x20] sm:$0xff]
        %v109 = vld [vmem:[#allocation8 + $0x28] sm:$0xff]
        %v110 = vld [vmem:[#allocation8 + $0x30] sm:$0xff]
        %v111 = vld [vmem:[#allocation8 + $0x38] sm:$0xff]
        %v112 = vld [vmem:[#allocation8 + $0x40] sm:$0xff]
        %v113 = vld [vmem:[#allocation8 + $0x48] sm:$0xff]
        %v114 = vld [vmem:[#allocation8 + $0x50] sm:$0xff]
        %v115 = vld [vmem:[#allocation8 + $0x58] sm:$0xff]
        %v116 = vld [vmem:[#allocation8 + $0x60] sm:$0xff]
        %v117 = vld [vmem:[#allocation8 + $0x68] sm:$0xff]
        %v118 = vld [vmem:[#allocation8 + $0x70] sm:$0xff]
        %v119 = vld [vmem:[#allocation8 + $0x78] sm:$0xff]
        %v120 = vld [vmem:[#allocation8 + $0x80] sm:$0xff]
        %v121 = vld [vmem:[#allocation8 + $0x88] sm:$0xff]
        %v122 = vld [vmem:[#allocation8 + $0x90] sm:$0xff]
        %v123 = vld [vmem:[#allocation8 + $0x98] sm:$0xff]
        %v124 = vld [vmem:[#allocation8 + $0xa0] sm:$0xff]
        %v125 = vld [vmem:[#allocation8 + $0xa8] sm:$0xff]
        %v126 = vld [vmem:[#allocation8 + $0xb0] sm:$0xff]
        %v127 = vld [vmem:[#allocation8 + $0xb8] sm:$0xff]
        %v128 = vld [vmem:[#allocation8 + $0xc0] sm:$0xff]
        %v129 = vld [vmem:[#allocation8 + $0xc8] sm:$0xff]
        %v130 = vld [vmem:[#allocation8 + $0xd0] sm:$0xff]
        %v131 = vld [vmem:[#allocation8 + $0xd8] sm:$0xff]
        %v132 = vld [vmem:[#allocation8 + $0xe0] sm:$0xff]
        %v133 = vld [vmem:[#allocation8 + $0xe8] sm:$0xff]
        %v134 = vld [vmem:[#allocation8 + $0xf0] sm:$0xff]
        %v135 = vld [vmem:[#allocation8 + $0xf8] sm:$0xff]
        %136 = vmatprep.subr.mxu0 %v105
        %137 = vmatpush1.msra.mxu0 %v104
        %138 = vmatprep.subr.mxu0 %v107
        %139 = vmatpush1.msra.mxu0 %v106
        %140 = vmatprep.subr.mxu0 %v109
        %141 = vmatpush1.msra.mxu0 %v108
        %142 = vmatprep.subr.mxu0 %v111
        %143 = vmatpush1.msra.mxu0 %v110
        %144 = vmatprep.subr.mxu0 %v113
        %145 = vmatpush1.msra.mxu0 %v112
        %146 = vmatprep.subr.mxu0 %v115
        %147 = vmatpush1.msra.mxu0 %v114
        %148 = vmatprep.subr.mxu0 %v117
        %149 = vmatpush1.msra.mxu0 %v116
        %150 = vmatprep.subr.mxu0 %v119
        %151 = vmatpush1.msra.mxu0 %v118
        %152 = vmatprep.subr.mxu0 %v121
        %153 = vmatpush1.msra.mxu0 %v120
        %154 = vmatprep.subr.mxu0 %v123
        %155 = vmatpush1.msra.mxu0 %v122
        %156 = vmatprep.subr.mxu0 %v125
        %157 = vmatpush1.msra.mxu0 %v124
        %158 = vmatprep.subr.mxu0 %v127
        %159 = vmatpush1.msra.mxu0 %v126
        %160 = vmatprep.subr.mxu0 %v129
        %161 = vmatpush1.msra.mxu0 %v128
        %162 = vmatprep.subr.mxu0 %v131
        %163 = vmatpush1.msra.mxu0 %v130
        %164 = vmatprep.subr.mxu0 %v133
        %165 = vmatpush1.msra.mxu0 %v132
        %166 = vmatprep.subr.mxu0 %v135
        %167 = vmatpush1.msra.mxu0 %v134
        %168 = vmatprep.subr.mxu0 0.0
        %169 = vmatpush1.msra.mxu0 0.0
        %170 = vmatprep.subr.mxu0 0.0
        %171 = vmatpush1.msra.mxu0 0.0
        %172 = vmatprep.subr.mxu0 0.0
        %173 = vmatpush1.msra.mxu0 0.0
        %174 = vmatprep.subr.mxu0 0.0
        %175 = vmatpush1.msra.mxu0 0.0
        %176 = vmatprep.subr.mxu0 0.0
        %177 = vmatpush1.msra.mxu0 0.0
        %178 = vmatprep.subr.mxu0 0.0
        %179 = vmatpush1.msra.mxu0 0.0
        %180 = vmatprep.subr.mxu0 0.0
        %181 = vmatpush1.msra.mxu0 0.0
        %182 = vmatprep.subr.mxu0 0.0
        %183 = vmatpush1.msra.mxu0 0.0
        %184 = vmatprep.subr.mxu0 0.0
        %185 = vmatpush1.msra.mxu0 0.0
        %186 = vmatprep.subr.mxu0 0.0
        %187 = vmatpush1.msra.mxu0 0.0
        %188 = vmatprep.subr.mxu0 0.0
        %189 = vmatpush1.msra.mxu0 0.0
        %190 = vmatprep.subr.mxu0 0.0
        %191 = vmatpush1.msra.mxu0 0.0
        %192 = vmatprep.subr.mxu0 0.0
        %193 = vmatpush1.msra.mxu0 0.0
        %194 = vmatprep.subr.mxu0 0.0
        %195 = vmatpush1.msra.mxu0 0.0
        %196 = vmatprep.subr.mxu0 0.0
        %197 = vmatpush1.msra.mxu0 0.0
        %198 = vmatprep.subr.mxu0 0.0
        %199 = vmatpush1.msra.mxu0 0.0
        %200 = vmatprep.mubr.f32.mxu0 0.0
        %201 = vmatmul.mubr.f32.gmra.mrb[0].mxu0 %v103
        %v202 = vpop.f32.mrb[0].mxu0
        %v203 = vadd.f32 0.0, %v202
        %v204 = vpop.f32.mrb[0].mxu0
        %v205 = vadd.f32 0.0, %v204
        %206 = vdwg.mxu0
        %v207 = vmul.f32 %v203, 0.5
        %v208 = vtanh.pop %v207
        %v209 = vadd.f32 %v208, 1.0
        %v210 = vmul.f32 %v209, 0.5
        %v211 = vmul.f32 %v205, 0.5
        %v212 = vtanh.pop %v211
        %v213 = vadd.f32 %v212, 1.0
        %v214 = vmul.f32 %v213, 0.5
        %v215 = vmul.f32 %v210, %v103
        %v216 = vld [vmem:[#allocation10] sm:$0xff]
        %v217 = vld [vmem:[#allocation10 + $0x8] sm:$0xff]
        %v218 = vld [vmem:[#allocation10 + $0x10] sm:$0xff]
        %v219 = vld [vmem:[#allocation10 + $0x18] sm:$0xff]
        %v220 = vld [vmem:[#allocation10 + $0x20] sm:$0xff]
        %v221 = vld [vmem:[#allocation10 + $0x28] sm:$0xff]
        %v222 = vld [vmem:[#allocation10 + $0x30] sm:$0xff]
        %v223 = vld [vmem:[#allocation10 + $0x38] sm:$0xff]
        %v224 = vld [vmem:[#allocation10 + $0x40] sm:$0xff]
        %v225 = vld [vmem:[#allocation10 + $0x48] sm:$0xff]
        %v226 = vld [vmem:[#allocation10 + $0x50] sm:$0xff]
        %v227 = vld [vmem:[#allocation10 + $0x58] sm:$0xff]
        %v228 = vld [vmem:[#allocation10 + $0x60] sm:$0xff]
        %v229 = vld [vmem:[#allocation10 + $0x68] sm:$0xff]
        %v230 = vld [vmem:[#allocation10 + $0x70] sm:$0xff]
        %v231 = vld [vmem:[#allocation10 + $0x78] sm:$0xff]
        %232 = vmatprep.subr.mxu0 0.0
        %233 = vmatpush1.msra.mxu0 %v216
        %234 = vmatprep.subr.mxu0 0.0
        %235 = vmatpush1.msra.mxu0 %v217
        %236 = vmatprep.subr.mxu0 0.0
        %237 = vmatpush1.msra.mxu0 %v218
        %238 = vmatprep.subr.mxu0 0.0
        %239 = vmatpush1.msra.mxu0 %v219
        %240 = vmatprep.subr.mxu0 0.0
        %241 = vmatpush1.msra.mxu0 %v220
        %242 = vmatprep.subr.mxu0 0.0
        %243 = vmatpush1.msra.mxu0 %v221
        %244 = vmatprep.subr.mxu0 0.0
        %245 = vmatpush1.msra.mxu0 %v222
        %246 = vmatprep.subr.mxu0 0.0
        %247 = vmatpush1.msra.mxu0 %v223
        %248 = vmatprep.subr.mxu0 0.0
        %249 = vmatpush1.msra.mxu0 %v224
        %250 = vmatprep.subr.mxu0 0.0
        %251 = vmatpush1.msra.mxu0 %v225
        %252 = vmatprep.subr.mxu0 0.0
        %253 = vmatpush1.msra.mxu0 %v226
        %254 = vmatprep.subr.mxu0 0.0
        %255 = vmatpush1.msra.mxu0 %v227
        %256 = vmatprep.subr.mxu0 0.0
        %257 = vmatpush1.msra.mxu0 %v228
        %258 = vmatprep.subr.mxu0 0.0
        %259 = vmatpush1.msra.mxu0 %v229
        %260 = vmatprep.subr.mxu0 0.0
        %261 = vmatpush1.msra.mxu0 %v230
        %262 = vmatprep.subr.mxu0 0.0
        %263 = vmatpush1.msra.mxu0 %v231
        %264 = vmatprep.subr.mxu0 0.0
        %265 = vmatpush1.msra.mxu0 0.0
        %266 = vmatprep.subr.mxu0 0.0
        %267 = vmatpush1.msra.mxu0 0.0
        %268 = vmatprep.subr.mxu0 0.0
        %269 = vmatpush1.msra.mxu0 0.0
        %270 = vmatprep.subr.mxu0 0.0
        %271 = vmatpush1.msra.mxu0 0.0
        %272 = vmatprep.subr.mxu0 0.0
        %273 = vmatpush1.msra.mxu0 0.0
        %274 = vmatprep.subr.mxu0 0.0
        %275 = vmatpush1.msra.mxu0 0.0
        %276 = vmatprep.subr.mxu0 0.0
        %277 = vmatpush1.msra.mxu0 0.0
        %278 = vmatprep.subr.mxu0 0.0
        %279 = vmatpush1.msra.mxu0 0.0
        %280 = vmatprep.subr.mxu0 0.0
        %281 = vmatpush1.msra.mxu0 0.0
        %282 = vmatprep.subr.mxu0 0.0
        %283 = vmatpush1.msra.mxu0 0.0
        %284 = vmatprep.subr.mxu0 0.0
        %285 = vmatpush1.msra.mxu0 0.0
        %286 = vmatprep.subr.mxu0 0.0
        %287 = vmatpush1.msra.mxu0 0.0
        %288 = vmatprep.subr.mxu0 0.0
        %289 = vmatpush1.msra.mxu0 0.0
        %290 = vmatprep.subr.mxu0 0.0
        %291 = vmatpush1.msra.mxu0 0.0
        %292 = vmatprep.subr.mxu0 0.0
        %293 = vmatpush1.msra.mxu0 0.0
        %294 = vmatprep.subr.mxu0 0.0
        %295 = vmatpush1.msra.mxu0 0.0
        %296 = vmatprep.mubr.f32.mxu0 0.0
        %297 = vmatmul.mubr.f32.gmra.mrb[0].mxu0 %v215
        %v298 = vpop.f32.mrb[0].mxu0
        %v299 = vadd.f32 0.0, %v298
        %v300 = vpop.f32.mrb[0].mxu0
        %301 = vdwg.mxu0
        %v302 = vtanh.pop %v299
        %v303 = vsub.f32 1.0, %v214
        %v304 = vsub.f32 %v302, %v103
        %v305 = vmul.f32 %v303, %v304
        %v306 = vadd.f32 %v103, %v305
      $region53: #{tpu_custom_call.1} parent=45 // loop_footer
        %s100 = sadd.s32 %s98, 1
      $region54: #{tpu_custom_call.1} parent=45 // loop_footer_branch
        %97 = sbr.rel target = $region50
      $region55: #{tpu_custom_call.1} parent=45 // loop_exit
        _
      %s307 = smul.u32 %s88, 3
      %s308 = smul.addr %s307, 8
      %s309 = scalar_lea.vmem [#allocation5], %s308
      %v310 = vld [vmem:[%s309] sm:$0xff]
      %v311 = vld [vmem:[%s309 + $0x8] sm:$0xff]
      %v312 = vld [vmem:[%s309 + $0x10] sm:$0xff]
      %v313 = vld [vmem:[#allocation11] sm:$0xff]
      %v314 = vld [vmem:[#allocation11 + $0x8] sm:$0xff]
      %v315 = vld [vmem:[#allocation11 + $0x10] sm:$0xff]
      %v316 = vld [vmem:[#allocation11 + $0x18] sm:$0xff]
      %v317 = vld [vmem:[#allocation11 + $0x20] sm:$0xff]
      %v318 = vld [vmem:[#allocation11 + $0x28] sm:$0xff]
      %v319 = vld [vmem:[#allocation11 + $0x30] sm:$0xff]
      %v320 = vld [vmem:[#allocation11 + $0x38] sm:$0xff]
      %v321 = vld [vmem:[#allocation11 + $0x40] sm:$0xff]
      %v322 = vld [vmem:[#allocation11 + $0x48] sm:$0xff]
      %v323 = vld [vmem:[#allocation11 + $0x50] sm:$0xff]
      %v324 = vld [vmem:[#allocation11 + $0x58] sm:$0xff]
      %v325 = vld [vmem:[#allocation11 + $0x60] sm:$0xff]
      %v326 = vld [vmem:[#allocation11 + $0x68] sm:$0xff]
      %v327 = vld [vmem:[#allocation11 + $0x70] sm:$0xff]
      %v328 = vld [vmem:[#allocation11 + $0x78] sm:$0xff]
      %v329 = vld [vmem:[#allocation11 + $0x80] sm:$0xff]
      %v330 = vld [vmem:[#allocation11 + $0x88] sm:$0xff]
      %v331 = vld [vmem:[#allocation11 + $0x90] sm:$0xff]
      %v332 = vld [vmem:[#allocation11 + $0x98] sm:$0xff]
      %v333 = vld [vmem:[#allocation11 + $0xa0] sm:$0xff]
      %v334 = vld [vmem:[#allocation11 + $0xa8] sm:$0xff]
      %v335 = vld [vmem:[#allocation11 + $0xb0] sm:$0xff]
      %v336 = vld [vmem:[#allocation11 + $0xb8] sm:$0xff]
      %v337 = vld [vmem:[#allocation11 + $0xc0] sm:$0xff]
      %v338 = vld [vmem:[#allocation11 + $0xc8] sm:$0xff]
      %v339 = vld [vmem:[#allocation11 + $0xd0] sm:$0xff]
      %v340 = vld [vmem:[#allocation11 + $0xd8] sm:$0xff]
      %v341 = vld [vmem:[#allocation11 + $0xe0] sm:$0xff]
      %v342 = vld [vmem:[#allocation11 + $0xe8] sm:$0xff]
      %v343 = vld [vmem:[#allocation11 + $0xf0] sm:$0xff]
      %v344 = vld [vmem:[#allocation11 + $0xf8] sm:$0xff]
      %v345 = vld [vmem:[#allocation11 + $0x100] sm:$0xff]
      %v346 = vld [vmem:[#allocation11 + $0x108] sm:$0xff]
      %v347 = vld [vmem:[#allocation11 + $0x110] sm:$0xff]
      %v348 = vld [vmem:[#allocation11 + $0x118] sm:$0xff]
      %v349 = vld [vmem:[#allocation11 + $0x120] sm:$0xff]
      %v350 = vld [vmem:[#allocation11 + $0x128] sm:$0xff]
      %v351 = vld [vmem:[#allocation11 + $0x130] sm:$0xff]
      %v352 = vld [vmem:[#allocation11 + $0x138] sm:$0xff]
      %v353 = vld [vmem:[#allocation11 + $0x140] sm:$0xff]
      %v354 = vld [vmem:[#allocation11 + $0x148] sm:$0xff]
      %v355 = vld [vmem:[#allocation11 + $0x150] sm:$0xff]
      %v356 = vld [vmem:[#allocation11 + $0x158] sm:$0xff]
      %v357 = vld [vmem:[#allocation11 + $0x160] sm:$0xff]
      %v358 = vld [vmem:[#allocation11 + $0x168] sm:$0xff]
      %v359 = vld [vmem:[#allocation11 + $0x170] sm:$0xff]
      %v360 = vld [vmem:[#allocation11 + $0x178] sm:$0xff]
      %361 = vmatprep.subr.mxu0 %v314
      %362 = vmatpush1.msra.mxu0 %v313
      %363 = vmatprep.subr.mxu0 %v317
      %364 = vmatpush1.msra.mxu0 %v316
      %365 = vmatprep.subr.mxu0 %v320
      %366 = vmatpush1.msra.mxu0 %v319
      %367 = vmatprep.subr.mxu0 %v323
      %368 = vmatpush1.msra.mxu0 %v322
      %369 = vmatprep.subr.mxu0 %v326
      %370 = vmatpush1.msra.mxu0 %v325
      %371 = vmatprep.subr.mxu0 %v329
      %372 = vmatpush1.msra.mxu0 %v328
      %373 = vmatprep.subr.mxu0 %v332
      %374 = vmatpush1.msra.mxu0 %v331
      %375 = vmatprep.subr.mxu0 %v335
      %376 = vmatpush1.msra.mxu0 %v334
      %377 = vmatprep.subr.mxu0 %v338
      %378 = vmatpush1.msra.mxu0 %v337
      %379 = vmatprep.subr.mxu0 %v341
      %380 = vmatpush1.msra.mxu0 %v340
      %381 = vmatprep.subr.mxu0 %v344
      %382 = vmatpush1.msra.mxu0 %v343
      %383 = vmatprep.subr.mxu0 %v347
      %384 = vmatpush1.msra.mxu0 %v346
      %385 = vmatprep.subr.mxu0 %v350
      %386 = vmatpush1.msra.mxu0 %v349
      %387 = vmatprep.subr.mxu0 %v353
      %388 = vmatpush1.msra.mxu0 %v352
      %389 = vmatprep.subr.mxu0 %v356
      %390 = vmatpush1.msra.mxu0 %v355
      %391 = vmatprep.subr.mxu0 %v359
      %392 = vmatpush1.msra.mxu0 %v358
      %393 = vmatprep.subr.mxu0 0.0
      %394 = vmatpush1.msra.mxu0 0.0
      %395 = vmatprep.subr.mxu0 0.0
      %396 = vmatpush1.msra.mxu0 0.0
      %397 = vmatprep.subr.mxu0 0.0
      %398 = vmatpush1.msra.mxu0 0.0
      %399 = vmatprep.subr.mxu0 0.0
      %400 = vmatpush1.msra.mxu0 0.0
      %401 = vmatprep.subr.mxu0 0.0
      %402 = vmatpush1.msra.mxu0 0.0
      %403 = vmatprep.subr.mxu0 0.0
      %404 = vmatpush1.msra.mxu0 0.0
      %405 = vmatprep.subr.mxu0 0.0
      %406 = vmatpush1.msra.mxu0 0.0
      %407 = vmatprep.subr.mxu0 0.0
      %408 = vmatpush1.msra.mxu0 0.0
      %409 = vmatprep.subr.mxu0 0.0
      %410 = vmatpush1.msra.mxu0 0.0
      %411 = vmatprep.subr.mxu0 0.0
      %412 = vmatpush1.msra.mxu0 0.0
      %413 = vmatprep.subr.mxu0 0.0
      %414 = vmatpush1.msra.mxu0 0.0
      %415 = vmatprep.subr.mxu0 0.0
      %416 = vmatpush1.msra.mxu0 0.0
      %417 = vmatprep.subr.mxu0 0.0
      %418 = vmatpush1.msra.mxu0 0.0
      %419 = vmatprep.subr.mxu0 0.0
      %420 = vmatpush1.msra.mxu0 0.0
      %421 = vmatprep.subr.mxu0 0.0
      %422 = vmatpush1.msra.mxu0 0.0
      %423 = vmatprep.subr.mxu0 0.0
      %424 = vmatpush1.msra.mxu0 0.0
      %425 = vmatprep.mubr.f32.mxu0 0.0
      %426 = vmatmul.mubr.f32.gmra.mrb[0].mxu0 %v103
      %v427 = vpop.f32.mrb[0].mxu0
      %v428 = vadd.f32 0.0, %v427
      %v429 = vpop.f32.mrb[0].mxu0
      %v430 = vadd.f32 0.0, %v429
      %431 = vdwg.mxu0
      %432 = vmatprep.subr.mxu0 0.0
      %433 = vmatpush1.msra.mxu0 %v315
      %434 = vmatprep.subr.mxu0 0.0
      %435 = vmatpush1.msra.mxu0 %v318
      %436 = vmatprep.subr.mxu0 0.0
      %437 = vmatpush1.msra.mxu0 %v321
      %438 = vmatprep.subr.mxu0 0.0
      %439 = vmatpush1.msra.mxu0 %v324
      %440 = vmatprep.subr.mxu0 0.0
      %441 = vmatpush1.msra.mxu0 %v327
      %442 = vmatprep.subr.mxu0 0.0
      %443 = vmatpush1.msra.mxu0 %v330
      %444 = vmatprep.subr.mxu0 0.0
      %445 = vmatpush1.msra.mxu0 %v333
      %446 = vmatprep.subr.mxu0 0.0
      %447 = vmatpush1.msra.mxu0 %v336
      %448 = vmatprep.subr.mxu0 0.0
      %449 = vmatpush1.msra.mxu0 %v339
      %450 = vmatprep.subr.mxu0 0.0
      %451 = vmatpush1.msra.mxu0 %v342
      %452 = vmatprep.subr.mxu0 0.0
      %453 = vmatpush1.msra.mxu0 %v345
      %454 = vmatprep.subr.mxu0 0.0
      %455 = vmatpush1.msra.mxu0 %v348
      %456 = vmatprep.subr.mxu0 0.0
      %457 = vmatpush1.msra.mxu0 %v351
      %458 = vmatprep.subr.mxu0 0.0
      %459 = vmatpush1.msra.mxu0 %v354
      %460 = vmatprep.subr.mxu0 0.0
      %461 = vmatpush1.msra.mxu0 %v357
      %462 = vmatprep.subr.mxu0 0.0
      %463 = vmatpush1.msra.mxu0 %v360
      %464 = vmatprep.subr.mxu0 0.0
      %465 = vmatpush1.msra.mxu0 0.0
      %466 = vmatprep.subr.mxu0 0.0
      %467 = vmatpush1.msra.mxu0 0.0
      %468 = vmatprep.subr.mxu0 0.0
      %469 = vmatpush1.msra.mxu0 0.0
      %470 = vmatprep.subr.mxu0 0.0
      %471 = vmatpush1.msra.mxu0 0.0
      %472 = vmatprep.subr.mxu0 0.0
      %473 = vmatpush1.msra.mxu0 0.0
      %474 = vmatprep.subr.mxu0 0.0
      %475 = vmatpush1.msra.mxu0 0.0
      %476 = vmatprep.subr.mxu0 0.0
      %477 = vmatpush1.msra.mxu0 0.0
      %478 = vmatprep.subr.mxu0 0.0
      %479 = vmatpush1.msra.mxu0 0.0
      %480 = vmatprep.subr.mxu0 0.0
      %481 = vmatpush1.msra.mxu0 0.0
      %482 = vmatprep.subr.mxu0 0.0
      %483 = vmatpush1.msra.mxu0 0.0
      %484 = vmatprep.subr.mxu0 0.0
      %485 = vmatpush1.msra.mxu0 0.0
      %486 = vmatprep.subr.mxu0 0.0
      %487 = vmatpush1.msra.mxu0 0.0
      %488 = vmatprep.subr.mxu0 0.0
      %489 = vmatpush1.msra.mxu0 0.0
      %490 = vmatprep.subr.mxu0 0.0
      %491 = vmatpush1.msra.mxu0 0.0
      %492 = vmatprep.subr.mxu0 0.0
      %493 = vmatpush1.msra.mxu0 0.0
      %494 = vmatprep.subr.mxu0 0.0
      %495 = vmatpush1.msra.mxu0 0.0
      %496 = vmatprep.mubr.f32.mxu0 0.0
      %497 = vmatmul.mubr.f32.gmra.mrb[0].mxu0 %v103
      %v498 = vpop.f32.mrb[0].mxu0
      %v499 = vadd.f32 0.0, %v498
      %v500 = vpop.f32.mrb[0].mxu0
      %501 = vdwg.mxu0
      %v502 = vadd.f32 %v310, %v428
      %v503 = vmul.f32 %v502, 0.5
      %v504 = vtanh.pop %v503
      %v505 = vadd.f32 %v504, 1.0
      %v506 = vmul.f32 %v505, 0.5
      %v507 = vadd.f32 %v311, %v430
      %v508 = vmul.f32 %v507, 0.5
      %v509 = vtanh.pop %v508
      %v510 = vadd.f32 %v509, 1.0
      %v511 = vmul.f32 %v510, 0.5
      %v512 = vld [vmem:[%s5] sm:$0x1]
      %v514 = vlaneseq
      %v515 = vshrl.u32 %v514, 7
      %v516 = vsub.s32 0, %v515
      %v517 = vrot.slane %v512, %v516
      %v519 = vadd.f32 %v499, %v517
      %v520 = vmul.f32 %v506, %v519
      %v521 = vadd.f32 %v312, %v520
      %v522 = vtanh.pop %v521
      %v523 = vsub.f32 1.0, %v511
      %v524 = vmul.f32 %v523, %v522
      %v525 = vmul.f32 %v511, %v103
      %v526 = vadd.f32 %v524, %v525
      %s527 = smul.u32 %s88, 8
      %s528 = scalar_lea.vmem [#allocation13], %s527
      %529 = vst [vmem:[%s528] sm:$0xff] %v526
    $region46: #{tpu_custom_call.1} parent=1 // loop_footer
      %s92 = sadd.s32 1, %s88
    $region47: #{tpu_custom_call.1} parent=1 // loop_footer_branch
      %87 = sbr.rel target = $region43
    $region48: #{tpu_custom_call.1} parent=1 // loop_exit
      _
    %530 = vst [vmem:[#allocation2] sm:$0xff] %v93
    // Predicated region
    $region56: #{tpu_custom_call.1} parent=1 // pred_check
      _
    $region57: #{tpu_custom_call.1} parent=1 // pred_check_branch
      %532 = sbr.rel (0) target = $region59
    $region58: #{tpu_custom_call.1} parent=1 // pred_region
      %s534 = ssub.s32 1024, 1024
      %535 = vsyncadd [#allocation7], %s534
      %s536 = sshll.u32 [#allocation13], 4
      %s537 = int_to_ptr.vmem [resolvable:$true] %s536
      %542 = dma.vmem_to_hbm [thread:$0]  %s537, 1024, %s6, [#allocation7], 128, 128, 8
    $region59: #{tpu_custom_call.1} parent=1 // pred_fallthru
      _
    // Predicated region
    $region60: #{tpu_custom_call.1} parent=1 // pred_check
      _
    $region61: #{tpu_custom_call.1} parent=1 // pred_check_branch
      %544 = sbr.rel (0) target = $region63
    $region62: #{tpu_custom_call.1} parent=1 // pred_region
      %545 = dma.done [#allocation7], 1024
    $region63: #{tpu_custom_call.1} parent=1 // pred_fallthru
      _
    %546 = vsyncpa [#allocation6], 1
    %547 = vsyncpa [#allocation9], 1
    %548 = vsyncpa [#allocation12], 1
    %549 = vsyncpa [#allocation7], 1

// kernel: tpu_custom_call.1
$region0: #{tpu_custom_call.1}
  #allocation0 [shape = 'u32[]', space=smem, size = 0x4, offset = 0x4, fixed_abs, tag = 'smem constant byte address 0x4 - core index']
  #allocation1 [shape = 'u32[144,128]{1,0:T(1,128)}', space=vmem, size = 0x12000, scoped, tag = 'internal scratch']
  #allocation2 [shape = 'f32[8,128]{1,0:T(8,128)}', space=vmem, size = 0x1000, scoped, tag = 'scratch operand']
  #allocation3 [shape = 's32[1]{0}', space=sflag, size = 0x4, scoped, tag = 'scoped memory for tpu_custom_call.1']
  #allocation4 [shape = 'u8[512]{0}', space=smem, size = 0x200, scoped, tag = 'prefetched SMEM operand 0']
  %s0 = inlined_call_operand.hbm [shape: s32[8], index: 0, kind: input, shape index: {}]
  %s1 = inlined_call_operand.hbm [shape: f32[8,8,384], index: 1, kind: input, shape index: {}]
  %s2 = inlined_call_operand.hbm [shape: f32[128,256], index: 2, kind: input, shape index: {}]
  %s3 = inlined_call_operand.hbm [shape: f32[128,128], index: 3, kind: input, shape index: {}]
  %s4 = inlined_call_operand.hbm [shape: f32[128,384], index: 4, kind: input, shape index: {}]
  %s5 = inlined_call_operand.vmem [shape: f32[1,128], index: 5, kind: input, shape index: {}]
  %s6 = inlined_call_operand.hbm [shape: f32[8,8,128], index: 6, kind: output, shape index: {}]
  %s7 = sld [smem:[#allocation0]]
  $region64: #{tpu_custom_call.1} parent=0
    _
  %s9 = ssub.s32 1, %s7
  %s10 = scalar_select 0, %s9, %s7
  %12 = dma.hbm_to_smem %s0, 16, [#allocation4], [#allocation3]
  %13 = dma.done [#allocation3], 16
  %14 = sfence
  $region1: #{tpu_custom_call.1} parent=0
    #allocation5 [shape = 'u8[98304]{0}', space=vmem, size = 0x18000, scoped, tag = 'input window, operand 1, single buffered']
    #allocation6 [shape = 's32[1]{0}', space=sflag, size = 0x4, scoped, tag = 'scoped memory for tpu_custom_call.1']
    #allocation7 [shape = 's32[1]{0}', space=sflag, size = 0x4, scoped, tag = 'scoped memory for tpu_custom_call.1']
    #allocation8 [shape = 'u8[131072]{0}', space=vmem, size = 0x20000, scoped, tag = 'input window, operand 2, single buffered']
    #allocation9 [shape = 's32[1]{0}', space=sflag, size = 0x4, scoped, tag = 'scoped memory for tpu_custom_call.1']
    #allocation10 [shape = 'u8[65536]{0}', space=vmem, size = 0x10000, scoped, tag = 'input window, operand 3, single buffered']
    #allocation11 [shape = 'u8[196608]{0}', space=vmem, size = 0x30000, scoped, tag = 'input window, operand 4, single buffered']
    #allocation12 [shape = 's32[1]{0}', space=sflag, size = 0x4, scoped, tag = 'scoped memory for tpu_custom_call.1']
    #allocation13 [shape = 'u8[32768]{0}', space=vmem, size = 0x8000, scoped, tag = 'output window, operand 0, single buffered']
    %15 = vsyncpa [#allocation6], 0
    %16 = vsyncpa [#allocation9], 0
    %17 = vsyncpa [#allocation12], 0
    %18 = vsyncpa [#allocation7], 0
    // Predicated region
    $region2: #{tpu_custom_call.1} parent=1 // pred_check
      _
    $region3: #{tpu_custom_call.1} parent=1 // pred_check_branch
      %20 = sbr.rel (0) target = $region5
    $region4: #{tpu_custom_call.1} parent=1 // pred_region
      %s22 = ssub.s32 3072, 3072
      %23 = vsyncadd [#allocation6], %s22
      %s24 = sshll.u32 [#allocation5], 4
      %s25 = int_to_ptr.vmem [resolvable:$true] %s24
      %30 = dma.hbm_to_vmem [thread:$0]  %s1, 3072, %s25, [#allocation6], 384, 384, 24
    $region5: #{tpu_custom_call.1} parent=1 // pred_fallthru
      _
    // Predicated region
    $region6: #{tpu_custom_call.1} parent=1 // pred_check
      _
    $region7: #{tpu_custom_call.1} parent=1 // pred_check_branch
      %32 = sbr.rel (0) target = $region9
    $region8: #{tpu_custom_call.1} parent=1 // pred_region
      %s34 = ssub.s32 4096, 4096
      %35 = vsyncadd [#allocation9], %s34
      %s36 = sshll.u32 [#allocation8], 4
      %s37 = int_to_ptr.vmem [resolvable:$true] %s36
      %42 = dma.hbm_to_vmem [thread:$0]  %s2, 4096, %s37, [#allocation9], 256, 256, 16
    $region9: #{tpu_custom_call.1} parent=1 // pred_fallthru
      _
    // Predicated region
    $region10: #{tpu_custom_call.1} parent=1 // pred_check
      _
    $region11: #{tpu_custom_call.1} parent=1 // pred_check_branch
      %44 = sbr.rel (0) target = $region13
    $region12: #{tpu_custom_call.1} parent=1 // pred_region
      %s46 = ssub.s32 2048, 2048
      %47 = vsyncadd [#allocation9], %s46
      %s48 = sshll.u32 [#allocation10], 4
      %s49 = int_to_ptr.vmem [resolvable:$true] %s48
      %54 = dma.hbm_to_vmem [thread:$0]  %s3, 2048, %s49, [#allocation9], 128, 128, 8
    $region13: #{tpu_custom_call.1} parent=1 // pred_fallthru
      _
    // Predicated region
    $region14: #{tpu_custom_call.1} parent=1 // pred_check
      _
    $region15: #{tpu_custom_call.1} parent=1 // pred_check_branch
      %56 = sbr.rel (0) target = $region17
    $region16: #{tpu_custom_call.1} parent=1 // pred_region
      %s58 = ssub.s32 6144, 6144
      %59 = vsyncadd [#allocation12], %s58
      %s60 = sshll.u32 [#allocation11], 4
      %s61 = int_to_ptr.vmem [resolvable:$true] %s60
      %66 = dma.hbm_to_vmem [thread:$0]  %s4, 6144, %s61, [#allocation12], 384, 384, 24
    $region17: #{tpu_custom_call.1} parent=1 // pred_fallthru
      _
    // Predicated region
    $region18: #{tpu_custom_call.1} parent=1 // pred_check
      _
    $region19: #{tpu_custom_call.1} parent=1 // pred_check_branch
      %68 = sbr.rel (0) target = $region21
    $region20: #{tpu_custom_call.1} parent=1 // pred_region
      _
    $region21: #{tpu_custom_call.1} parent=1 // pred_fallthru
      _
    // Predicated region
    $region22: #{tpu_custom_call.1} parent=1 // pred_check
      _
    $region23: #{tpu_custom_call.1} parent=1 // pred_check_branch
      %70 = sbr.rel (0) target = $region25
    $region24: #{tpu_custom_call.1} parent=1 // pred_region
      %71 = dma.done [#allocation6], 3072
    $region25: #{tpu_custom_call.1} parent=1 // pred_fallthru
      _
    // Predicated region
    $region26: #{tpu_custom_call.1} parent=1 // pred_check
      _
    $region27: #{tpu_custom_call.1} parent=1 // pred_check_branch
      %73 = sbr.rel (0) target = $region29
    $region28: #{tpu_custom_call.1} parent=1 // pred_region
      %74 = dma.done [#allocation9], 4096
    $region29: #{tpu_custom_call.1} parent=1 // pred_fallthru
      _
    // Predicated region
    $region30: #{tpu_custom_call.1} parent=1 // pred_check
      _
    $region31: #{tpu_custom_call.1} parent=1 // pred_check_branch
      %76 = sbr.rel (0) target = $region33
    $region32: #{tpu_custom_call.1} parent=1 // pred_region
      %77 = dma.done [#allocation9], 2048
    $region33: #{tpu_custom_call.1} parent=1 // pred_fallthru
      _
    // Predicated region
    $region34: #{tpu_custom_call.1} parent=1 // pred_check
      _
    $region35: #{tpu_custom_call.1} parent=1 // pred_check_branch
      %79 = sbr.rel (0) target = $region37
    $region36: #{tpu_custom_call.1} parent=1 // pred_region
      %80 = dma.done [#allocation12], 6144
    $region37: #{tpu_custom_call.1} parent=1 // pred_fallthru
      _
    %p81 = scmp.eq.s32.totalorder 0, 0
    // Predicated region
    $region38: #{tpu_custom_call.1} parent=1 // pred_check
      %p82 = pneg %p81
    $region39: #{tpu_custom_call.1} parent=1 // pred_check_branch
      %84 = sbr.rel (%p82) target = $region41
    $region40: #{tpu_custom_call.1} parent=1 // pred_region
      %85 = vst [vmem:[#allocation2] sm:$0xff] 0.0
    $region41: #{tpu_custom_call.1} parent=1 // pred_fallthru
      _
    %v86 = vld [vmem:[#allocation2] sm:$0xff]
    loop: start=0, step=1, limit=8
    $region42: #{tpu_custom_call.1} parent=1 // loop_pre_header
      _
    $region43: #{tpu_custom_call.1} parent=1 // loop_header
      %s88 = sphi 0, %s92
      %p89 = scmp.ge.s32.totalorder %s88, 8
      %v93 = vphi %v86, %v526
    $region44: #{tpu_custom_call.1} parent=1 // loop_header_branch
      %91 = sbr.rel (%p89) target = $region48
    $region45: #{tpu_custom_call.1} parent=1 // loop_body
      %s94 = smul.u32 0, 8
      %s95 = sadd.s32 %s94, %s88
      %s96 = sld [smem:[#allocation4 + %s95]]
      // While loop
      $region49: #{tpu_custom_call.1} parent=45 // loop_pre_header
        _
      $region50: #{tpu_custom_call.1} parent=45 // loop_header
        %s98 = sphi 0, %s100
        %p99 = scmp.ge.s32.totalorder %s98, %s96
        %v103 = vphi %v93, %v306
      $region51: #{tpu_custom_call.1} parent=45 // loop_header_branch
        %102 = sbr.rel (%p99) target = $region55
      $region52: #{tpu_custom_call.1} parent=45 // loop_body
        %v104 = vld [vmem:[#allocation8] sm:$0xff]
        %v105 = vld [vmem:[#allocation8 + $0x8] sm:$0xff]
        %v106 = vld [vmem:[#allocation8 + $0x10] sm:$0xff]
        %v107 = vld [vmem:[#allocation8 + $0x18] sm:$0xff]
        %v108 = vld [vmem:[#allocation8 + $0x20] sm:$0xff]
        %v109 = vld [vmem:[#allocation8 + $0x28] sm:$0xff]
        %v110 = vld [vmem:[#allocation8 + $0x30] sm:$0xff]
        %v111 = vld [vmem:[#allocation8 + $0x38] sm:$0xff]
        %v112 = vld [vmem:[#allocation8 + $0x40] sm:$0xff]
        %v113 = vld [vmem:[#allocation8 + $0x48] sm:$0xff]
        %v114 = vld [vmem:[#allocation8 + $0x50] sm:$0xff]
        %v115 = vld [vmem:[#allocation8 + $0x58] sm:$0xff]
        %v116 = vld [vmem:[#allocation8 + $0x60] sm:$0xff]
        %v117 = vld [vmem:[#allocation8 + $0x68] sm:$0xff]
        %v118 = vld [vmem:[#allocation8 + $0x70] sm:$0xff]
        %v119 = vld [vmem:[#allocation8 + $0x78] sm:$0xff]
        %v120 = vld [vmem:[#allocation8 + $0x80] sm:$0xff]
        %v121 = vld [vmem:[#allocation8 + $0x88] sm:$0xff]
        %v122 = vld [vmem:[#allocation8 + $0x90] sm:$0xff]
        %v123 = vld [vmem:[#allocation8 + $0x98] sm:$0xff]
        %v124 = vld [vmem:[#allocation8 + $0xa0] sm:$0xff]
        %v125 = vld [vmem:[#allocation8 + $0xa8] sm:$0xff]
        %v126 = vld [vmem:[#allocation8 + $0xb0] sm:$0xff]
        %v127 = vld [vmem:[#allocation8 + $0xb8] sm:$0xff]
        %v128 = vld [vmem:[#allocation8 + $0xc0] sm:$0xff]
        %v129 = vld [vmem:[#allocation8 + $0xc8] sm:$0xff]
        %v130 = vld [vmem:[#allocation8 + $0xd0] sm:$0xff]
        %v131 = vld [vmem:[#allocation8 + $0xd8] sm:$0xff]
        %v132 = vld [vmem:[#allocation8 + $0xe0] sm:$0xff]
        %v133 = vld [vmem:[#allocation8 + $0xe8] sm:$0xff]
        %v134 = vld [vmem:[#allocation8 + $0xf0] sm:$0xff]
        %v135 = vld [vmem:[#allocation8 + $0xf8] sm:$0xff]
        %136 = vmatprep.subr.mxu0 %v105
        %137 = vmatpush1.msra.mxu0 %v104
        %138 = vmatprep.subr.mxu0 %v107
        %139 = vmatpush1.msra.mxu0 %v106
        %140 = vmatprep.subr.mxu0 %v109
        %141 = vmatpush1.msra.mxu0 %v108
        %142 = vmatprep.subr.mxu0 %v111
        %143 = vmatpush1.msra.mxu0 %v110
        %144 = vmatprep.subr.mxu0 %v113
        %145 = vmatpush1.msra.mxu0 %v112
        %146 = vmatprep.subr.mxu0 %v115
        %147 = vmatpush1.msra.mxu0 %v114
        %148 = vmatprep.subr.mxu0 %v117
        %149 = vmatpush1.msra.mxu0 %v116
        %150 = vmatprep.subr.mxu0 %v119
        %151 = vmatpush1.msra.mxu0 %v118
        %152 = vmatprep.subr.mxu0 %v121
        %153 = vmatpush1.msra.mxu0 %v120
        %154 = vmatprep.subr.mxu0 %v123
        %155 = vmatpush1.msra.mxu0 %v122
        %156 = vmatprep.subr.mxu0 %v125
        %157 = vmatpush1.msra.mxu0 %v124
        %158 = vmatprep.subr.mxu0 %v127
        %159 = vmatpush1.msra.mxu0 %v126
        %160 = vmatprep.subr.mxu0 %v129
        %161 = vmatpush1.msra.mxu0 %v128
        %162 = vmatprep.subr.mxu0 %v131
        %163 = vmatpush1.msra.mxu0 %v130
        %164 = vmatprep.subr.mxu0 %v133
        %165 = vmatpush1.msra.mxu0 %v132
        %166 = vmatprep.subr.mxu0 %v135
        %167 = vmatpush1.msra.mxu0 %v134
        %168 = vmatprep.subr.mxu0 0.0
        %169 = vmatpush1.msra.mxu0 0.0
        %170 = vmatprep.subr.mxu0 0.0
        %171 = vmatpush1.msra.mxu0 0.0
        %172 = vmatprep.subr.mxu0 0.0
        %173 = vmatpush1.msra.mxu0 0.0
        %174 = vmatprep.subr.mxu0 0.0
        %175 = vmatpush1.msra.mxu0 0.0
        %176 = vmatprep.subr.mxu0 0.0
        %177 = vmatpush1.msra.mxu0 0.0
        %178 = vmatprep.subr.mxu0 0.0
        %179 = vmatpush1.msra.mxu0 0.0
        %180 = vmatprep.subr.mxu0 0.0
        %181 = vmatpush1.msra.mxu0 0.0
        %182 = vmatprep.subr.mxu0 0.0
        %183 = vmatpush1.msra.mxu0 0.0
        %184 = vmatprep.subr.mxu0 0.0
        %185 = vmatpush1.msra.mxu0 0.0
        %186 = vmatprep.subr.mxu0 0.0
        %187 = vmatpush1.msra.mxu0 0.0
        %188 = vmatprep.subr.mxu0 0.0
        %189 = vmatpush1.msra.mxu0 0.0
        %190 = vmatprep.subr.mxu0 0.0
        %191 = vmatpush1.msra.mxu0 0.0
        %192 = vmatprep.subr.mxu0 0.0
        %193 = vmatpush1.msra.mxu0 0.0
        %194 = vmatprep.subr.mxu0 0.0
        %195 = vmatpush1.msra.mxu0 0.0
        %196 = vmatprep.subr.mxu0 0.0
        %197 = vmatpush1.msra.mxu0 0.0
        %198 = vmatprep.subr.mxu0 0.0
        %199 = vmatpush1.msra.mxu0 0.0
        %200 = vmatprep.mubr.f32.mxu0 0.0
        %201 = vmatmul.mubr.f32.gmra.mrb[0].mxu0 %v103
        %v202 = vpop.f32.mrb[0].mxu0
        %v203 = vadd.f32 0.0, %v202
        %v204 = vpop.f32.mrb[0].mxu0
        %v205 = vadd.f32 0.0, %v204
        %206 = vdwg.mxu0
        %v207 = vmul.f32 %v203, 0.5
        %v208 = vtanh.pop %v207
        %v209 = vadd.f32 %v208, 1.0
        %v210 = vmul.f32 %v209, 0.5
        %v211 = vmul.f32 %v205, 0.5
        %v212 = vtanh.pop %v211
        %v213 = vadd.f32 %v212, 1.0
        %v214 = vmul.f32 %v213, 0.5
        %v215 = vmul.f32 %v210, %v103
        %v216 = vld [vmem:[#allocation10] sm:$0xff]
        %v217 = vld [vmem:[#allocation10 + $0x8] sm:$0xff]
        %v218 = vld [vmem:[#allocation10 + $0x10] sm:$0xff]
        %v219 = vld [vmem:[#allocation10 + $0x18] sm:$0xff]
        %v220 = vld [vmem:[#allocation10 + $0x20] sm:$0xff]
        %v221 = vld [vmem:[#allocation10 + $0x28] sm:$0xff]
        %v222 = vld [vmem:[#allocation10 + $0x30] sm:$0xff]
        %v223 = vld [vmem:[#allocation10 + $0x38] sm:$0xff]
        %v224 = vld [vmem:[#allocation10 + $0x40] sm:$0xff]
        %v225 = vld [vmem:[#allocation10 + $0x48] sm:$0xff]
        %v226 = vld [vmem:[#allocation10 + $0x50] sm:$0xff]
        %v227 = vld [vmem:[#allocation10 + $0x58] sm:$0xff]
        %v228 = vld [vmem:[#allocation10 + $0x60] sm:$0xff]
        %v229 = vld [vmem:[#allocation10 + $0x68] sm:$0xff]
        %v230 = vld [vmem:[#allocation10 + $0x70] sm:$0xff]
        %v231 = vld [vmem:[#allocation10 + $0x78] sm:$0xff]
        %232 = vmatprep.subr.mxu0 0.0
        %233 = vmatpush1.msra.mxu0 %v216
        %234 = vmatprep.subr.mxu0 0.0
        %235 = vmatpush1.msra.mxu0 %v217
        %236 = vmatprep.subr.mxu0 0.0
        %237 = vmatpush1.msra.mxu0 %v218
        %238 = vmatprep.subr.mxu0 0.0
        %239 = vmatpush1.msra.mxu0 %v219
        %240 = vmatprep.subr.mxu0 0.0
        %241 = vmatpush1.msra.mxu0 %v220
        %242 = vmatprep.subr.mxu0 0.0
        %243 = vmatpush1.msra.mxu0 %v221
        %244 = vmatprep.subr.mxu0 0.0
        %245 = vmatpush1.msra.mxu0 %v222
        %246 = vmatprep.subr.mxu0 0.0
        %247 = vmatpush1.msra.mxu0 %v223
        %248 = vmatprep.subr.mxu0 0.0
        %249 = vmatpush1.msra.mxu0 %v224
        %250 = vmatprep.subr.mxu0 0.0
        %251 = vmatpush1.msra.mxu0 %v225
        %252 = vmatprep.subr.mxu0 0.0
        %253 = vmatpush1.msra.mxu0 %v226
        %254 = vmatprep.subr.mxu0 0.0
        %255 = vmatpush1.msra.mxu0 %v227
        %256 = vmatprep.subr.mxu0 0.0
        %257 = vmatpush1.msra.mxu0 %v228
        %258 = vmatprep.subr.mxu0 0.0
        %259 = vmatpush1.msra.mxu0 %v229
        %260 = vmatprep.subr.mxu0 0.0
        %261 = vmatpush1.msra.mxu0 %v230
        %262 = vmatprep.subr.mxu0 0.0
        %263 = vmatpush1.msra.mxu0 %v231
        %264 = vmatprep.subr.mxu0 0.0
        %265 = vmatpush1.msra.mxu0 0.0
        %266 = vmatprep.subr.mxu0 0.0
        %267 = vmatpush1.msra.mxu0 0.0
        %268 = vmatprep.subr.mxu0 0.0
        %269 = vmatpush1.msra.mxu0 0.0
        %270 = vmatprep.subr.mxu0 0.0
        %271 = vmatpush1.msra.mxu0 0.0
        %272 = vmatprep.subr.mxu0 0.0
        %273 = vmatpush1.msra.mxu0 0.0
        %274 = vmatprep.subr.mxu0 0.0
        %275 = vmatpush1.msra.mxu0 0.0
        %276 = vmatprep.subr.mxu0 0.0
        %277 = vmatpush1.msra.mxu0 0.0
        %278 = vmatprep.subr.mxu0 0.0
        %279 = vmatpush1.msra.mxu0 0.0
        %280 = vmatprep.subr.mxu0 0.0
        %281 = vmatpush1.msra.mxu0 0.0
        %282 = vmatprep.subr.mxu0 0.0
        %283 = vmatpush1.msra.mxu0 0.0
        %284 = vmatprep.subr.mxu0 0.0
        %285 = vmatpush1.msra.mxu0 0.0
        %286 = vmatprep.subr.mxu0 0.0
        %287 = vmatpush1.msra.mxu0 0.0
        %288 = vmatprep.subr.mxu0 0.0
        %289 = vmatpush1.msra.mxu0 0.0
        %290 = vmatprep.subr.mxu0 0.0
        %291 = vmatpush1.msra.mxu0 0.0
        %292 = vmatprep.subr.mxu0 0.0
        %293 = vmatpush1.msra.mxu0 0.0
        %294 = vmatprep.subr.mxu0 0.0
        %295 = vmatpush1.msra.mxu0 0.0
        %296 = vmatprep.mubr.f32.mxu0 0.0
        %297 = vmatmul.mubr.f32.gmra.mrb[0].mxu0 %v215
        %v298 = vpop.f32.mrb[0].mxu0
        %v299 = vadd.f32 0.0, %v298
        %v300 = vpop.f32.mrb[0].mxu0
        %301 = vdwg.mxu0
        %v302 = vtanh.pop %v299
        %v303 = vsub.f32 1.0, %v214
        %v304 = vsub.f32 %v302, %v103
        %v305 = vmul.f32 %v303, %v304
        %v306 = vadd.f32 %v103, %v305
      $region53: #{tpu_custom_call.1} parent=45 // loop_footer
        %s100 = sadd.s32 %s98, 1
      $region54: #{tpu_custom_call.1} parent=45 // loop_footer_branch
        %97 = sbr.rel target = $region50
      $region55: #{tpu_custom_call.1} parent=45 // loop_exit
        _
      %s307 = smul.u32 %s88, 3
      %s308 = smul.addr %s307, 8
      %s309 = scalar_lea.vmem [#allocation5], %s308
      %v310 = vld [vmem:[%s309] sm:$0xff]
      %v311 = vld [vmem:[%s309 + $0x8] sm:$0xff]
      %v312 = vld [vmem:[%s309 + $0x10] sm:$0xff]
      %v313 = vld [vmem:[#allocation11] sm:$0xff]
      %v314 = vld [vmem:[#allocation11 + $0x8] sm:$0xff]
      %v315 = vld [vmem:[#allocation11 + $0x10] sm:$0xff]
      %v316 = vld [vmem:[#allocation11 + $0x18] sm:$0xff]
      %v317 = vld [vmem:[#allocation11 + $0x20] sm:$0xff]
      %v318 = vld [vmem:[#allocation11 + $0x28] sm:$0xff]
      %v319 = vld [vmem:[#allocation11 + $0x30] sm:$0xff]
      %v320 = vld [vmem:[#allocation11 + $0x38] sm:$0xff]
      %v321 = vld [vmem:[#allocation11 + $0x40] sm:$0xff]
      %v322 = vld [vmem:[#allocation11 + $0x48] sm:$0xff]
      %v323 = vld [vmem:[#allocation11 + $0x50] sm:$0xff]
      %v324 = vld [vmem:[#allocation11 + $0x58] sm:$0xff]
      %v325 = vld [vmem:[#allocation11 + $0x60] sm:$0xff]
      %v326 = vld [vmem:[#allocation11 + $0x68] sm:$0xff]
      %v327 = vld [vmem:[#allocation11 + $0x70] sm:$0xff]
      %v328 = vld [vmem:[#allocation11 + $0x78] sm:$0xff]
      %v329 = vld [vmem:[#allocation11 + $0x80] sm:$0xff]
      %v330 = vld [vmem:[#allocation11 + $0x88] sm:$0xff]
      %v331 = vld [vmem:[#allocation11 + $0x90] sm:$0xff]
      %v332 = vld [vmem:[#allocation11 + $0x98] sm:$0xff]
      %v333 = vld [vmem:[#allocation11 + $0xa0] sm:$0xff]
      %v334 = vld [vmem:[#allocation11 + $0xa8] sm:$0xff]
      %v335 = vld [vmem:[#allocation11 + $0xb0] sm:$0xff]
      %v336 = vld [vmem:[#allocation11 + $0xb8] sm:$0xff]
      %v337 = vld [vmem:[#allocation11 + $0xc0] sm:$0xff]
      %v338 = vld [vmem:[#allocation11 + $0xc8] sm:$0xff]
      %v339 = vld [vmem:[#allocation11 + $0xd0] sm:$0xff]
      %v340 = vld [vmem:[#allocation11 + $0xd8] sm:$0xff]
      %v341 = vld [vmem:[#allocation11 + $0xe0] sm:$0xff]
      %v342 = vld [vmem:[#allocation11 + $0xe8] sm:$0xff]
      %v343 = vld [vmem:[#allocation11 + $0xf0] sm:$0xff]
      %v344 = vld [vmem:[#allocation11 + $0xf8] sm:$0xff]
      %v345 = vld [vmem:[#allocation11 + $0x100] sm:$0xff]
      %v346 = vld [vmem:[#allocation11 + $0x108] sm:$0xff]
      %v347 = vld [vmem:[#allocation11 + $0x110] sm:$0xff]
      %v348 = vld [vmem:[#allocation11 + $0x118] sm:$0xff]
      %v349 = vld [vmem:[#allocation11 + $0x120] sm:$0xff]
      %v350 = vld [vmem:[#allocation11 + $0x128] sm:$0xff]
      %v351 = vld [vmem:[#allocation11 + $0x130] sm:$0xff]
      %v352 = vld [vmem:[#allocation11 + $0x138] sm:$0xff]
      %v353 = vld [vmem:[#allocation11 + $0x140] sm:$0xff]
      %v354 = vld [vmem:[#allocation11 + $0x148] sm:$0xff]
      %v355 = vld [vmem:[#allocation11 + $0x150] sm:$0xff]
      %v356 = vld [vmem:[#allocation11 + $0x158] sm:$0xff]
      %v357 = vld [vmem:[#allocation11 + $0x160] sm:$0xff]
      %v358 = vld [vmem:[#allocation11 + $0x168] sm:$0xff]
      %v359 = vld [vmem:[#allocation11 + $0x170] sm:$0xff]
      %v360 = vld [vmem:[#allocation11 + $0x178] sm:$0xff]
      %361 = vmatprep.subr.mxu0 %v314
      %362 = vmatpush1.msra.mxu0 %v313
      %363 = vmatprep.subr.mxu0 %v317
      %364 = vmatpush1.msra.mxu0 %v316
      %365 = vmatprep.subr.mxu0 %v320
      %366 = vmatpush1.msra.mxu0 %v319
      %367 = vmatprep.subr.mxu0 %v323
      %368 = vmatpush1.msra.mxu0 %v322
      %369 = vmatprep.subr.mxu0 %v326
      %370 = vmatpush1.msra.mxu0 %v325
      %371 = vmatprep.subr.mxu0 %v329
      %372 = vmatpush1.msra.mxu0 %v328
      %373 = vmatprep.subr.mxu0 %v332
      %374 = vmatpush1.msra.mxu0 %v331
      %375 = vmatprep.subr.mxu0 %v335
      %376 = vmatpush1.msra.mxu0 %v334
      %377 = vmatprep.subr.mxu0 %v338
      %378 = vmatpush1.msra.mxu0 %v337
      %379 = vmatprep.subr.mxu0 %v341
      %380 = vmatpush1.msra.mxu0 %v340
      %381 = vmatprep.subr.mxu0 %v344
      %382 = vmatpush1.msra.mxu0 %v343
      %383 = vmatprep.subr.mxu0 %v347
      %384 = vmatpush1.msra.mxu0 %v346
      %385 = vmatprep.subr.mxu0 %v350
      %386 = vmatpush1.msra.mxu0 %v349
      %387 = vmatprep.subr.mxu0 %v353
      %388 = vmatpush1.msra.mxu0 %v352
      %389 = vmatprep.subr.mxu0 %v356
      %390 = vmatpush1.msra.mxu0 %v355
      %391 = vmatprep.subr.mxu0 %v359
      %392 = vmatpush1.msra.mxu0 %v358
      %393 = vmatprep.subr.mxu0 0.0
      %394 = vmatpush1.msra.mxu0 0.0
      %395 = vmatprep.subr.mxu0 0.0
      %396 = vmatpush1.msra.mxu0 0.0
      %397 = vmatprep.subr.mxu0 0.0
      %398 = vmatpush1.msra.mxu0 0.0
      %399 = vmatprep.subr.mxu0 0.0
      %400 = vmatpush1.msra.mxu0 0.0
      %401 = vmatprep.subr.mxu0 0.0
      %402 = vmatpush1.msra.mxu0 0.0
      %403 = vmatprep.subr.mxu0 0.0
      %404 = vmatpush1.msra.mxu0 0.0
      %405 = vmatprep.subr.mxu0 0.0
      %406 = vmatpush1.msra.mxu0 0.0
      %407 = vmatprep.subr.mxu0 0.0
      %408 = vmatpush1.msra.mxu0 0.0
      %409 = vmatprep.subr.mxu0 0.0
      %410 = vmatpush1.msra.mxu0 0.0
      %411 = vmatprep.subr.mxu0 0.0
      %412 = vmatpush1.msra.mxu0 0.0
      %413 = vmatprep.subr.mxu0 0.0
      %414 = vmatpush1.msra.mxu0 0.0
      %415 = vmatprep.subr.mxu0 0.0
      %416 = vmatpush1.msra.mxu0 0.0
      %417 = vmatprep.subr.mxu0 0.0
      %418 = vmatpush1.msra.mxu0 0.0
      %419 = vmatprep.subr.mxu0 0.0
      %420 = vmatpush1.msra.mxu0 0.0
      %421 = vmatprep.subr.mxu0 0.0
      %422 = vmatpush1.msra.mxu0 0.0
      %423 = vmatprep.subr.mxu0 0.0
      %424 = vmatpush1.msra.mxu0 0.0
      %425 = vmatprep.mubr.f32.mxu0 0.0
      %426 = vmatmul.mubr.f32.gmra.mrb[0].mxu0 %v103
      %v427 = vpop.f32.mrb[0].mxu0
      %v428 = vadd.f32 0.0, %v427
      %v429 = vpop.f32.mrb[0].mxu0
      %v430 = vadd.f32 0.0, %v429
      %431 = vdwg.mxu0
      %432 = vmatprep.subr.mxu0 0.0
      %433 = vmatpush1.msra.mxu0 %v315
      %434 = vmatprep.subr.mxu0 0.0
      %435 = vmatpush1.msra.mxu0 %v318
      %436 = vmatprep.subr.mxu0 0.0
      %437 = vmatpush1.msra.mxu0 %v321
      %438 = vmatprep.subr.mxu0 0.0
      %439 = vmatpush1.msra.mxu0 %v324
      %440 = vmatprep.subr.mxu0 0.0
      %441 = vmatpush1.msra.mxu0 %v327
      %442 = vmatprep.subr.mxu0 0.0
      %443 = vmatpush1.msra.mxu0 %v330
      %444 = vmatprep.subr.mxu0 0.0
      %445 = vmatpush1.msra.mxu0 %v333
      %446 = vmatprep.subr.mxu0 0.0
      %447 = vmatpush1.msra.mxu0 %v336
      %448 = vmatprep.subr.mxu0 0.0
      %449 = vmatpush1.msra.mxu0 %v339
      %450 = vmatprep.subr.mxu0 0.0
      %451 = vmatpush1.msra.mxu0 %v342
      %452 = vmatprep.subr.mxu0 0.0
      %453 = vmatpush1.msra.mxu0 %v345
      %454 = vmatprep.subr.mxu0 0.0
      %455 = vmatpush1.msra.mxu0 %v348
      %456 = vmatprep.subr.mxu0 0.0
      %457 = vmatpush1.msra.mxu0 %v351
      %458 = vmatprep.subr.mxu0 0.0
      %459 = vmatpush1.msra.mxu0 %v354
      %460 = vmatprep.subr.mxu0 0.0
      %461 = vmatpush1.msra.mxu0 %v357
      %462 = vmatprep.subr.mxu0 0.0
      %463 = vmatpush1.msra.mxu0 %v360
      %464 = vmatprep.subr.mxu0 0.0
      %465 = vmatpush1.msra.mxu0 0.0
      %466 = vmatprep.subr.mxu0 0.0
      %467 = vmatpush1.msra.mxu0 0.0
      %468 = vmatprep.subr.mxu0 0.0
      %469 = vmatpush1.msra.mxu0 0.0
      %470 = vmatprep.subr.mxu0 0.0
      %471 = vmatpush1.msra.mxu0 0.0
      %472 = vmatprep.subr.mxu0 0.0
      %473 = vmatpush1.msra.mxu0 0.0
      %474 = vmatprep.subr.mxu0 0.0
      %475 = vmatpush1.msra.mxu0 0.0
      %476 = vmatprep.subr.mxu0 0.0
      %477 = vmatpush1.msra.mxu0 0.0
      %478 = vmatprep.subr.mxu0 0.0
      %479 = vmatpush1.msra.mxu0 0.0
      %480 = vmatprep.subr.mxu0 0.0
      %481 = vmatpush1.msra.mxu0 0.0
      %482 = vmatprep.subr.mxu0 0.0
      %483 = vmatpush1.msra.mxu0 0.0
      %484 = vmatprep.subr.mxu0 0.0
      %485 = vmatpush1.msra.mxu0 0.0
      %486 = vmatprep.subr.mxu0 0.0
      %487 = vmatpush1.msra.mxu0 0.0
      %488 = vmatprep.subr.mxu0 0.0
      %489 = vmatpush1.msra.mxu0 0.0
      %490 = vmatprep.subr.mxu0 0.0
      %491 = vmatpush1.msra.mxu0 0.0
      %492 = vmatprep.subr.mxu0 0.0
      %493 = vmatpush1.msra.mxu0 0.0
      %494 = vmatprep.subr.mxu0 0.0
      %495 = vmatpush1.msra.mxu0 0.0
      %496 = vmatprep.mubr.f32.mxu0 0.0
      %497 = vmatmul.mubr.f32.gmra.mrb[0].mxu0 %v103
      %v498 = vpop.f32.mrb[0].mxu0
      %v499 = vadd.f32 0.0, %v498
      %v500 = vpop.f32.mrb[0].mxu0
      %501 = vdwg.mxu0
      %v502 = vadd.f32 %v310, %v428
      %v503 = vmul.f32 %v502, 0.5
      %v504 = vtanh.pop %v503
      %v505 = vadd.f32 %v504, 1.0
      %v506 = vmul.f32 %v505, 0.5
      %v507 = vadd.f32 %v311, %v430
      %v508 = vmul.f32 %v507, 0.5
      %v509 = vtanh.pop %v508
      %v510 = vadd.f32 %v509, 1.0
      %v511 = vmul.f32 %v510, 0.5
      %v512 = vld [vmem:[%s5] sm:$0x1]
      %v514 = vlaneseq
      %v515 = vshrl.u32 %v514, 7
      %v516 = vsub.s32 0, %v515
      %v517 = vrot.slane %v512, %v516
      %v519 = vadd.f32 %v499, %v517
      %v520 = vmul.f32 %v506, %v519
      %v521 = vadd.f32 %v312, %v520
      %v522 = vtanh.pop %v521
      %v523 = vsub.f32 1.0, %v511
      %v524 = vmul.f32 %v523, %v522
      %v525 = vmul.f32 %v511, %v103
      %v526 = vadd.f32 %v524, %v525
      %s527 = smul.u32 %s88, 8
      %s528 = scalar_lea.vmem [#allocation13], %s527
      %529 = vst [vmem:[%s528] sm:$0xff] %v526
    $region46: #{tpu_custom_call.1} parent=1 // loop_footer
      %s92 = sadd.s32 1, %s88
    $region47: #{tpu_custom_call.1} parent=1 // loop_footer_branch
      %87 = sbr.rel target = $region43
    $region48: #{tpu_custom_call.1} parent=1 // loop_exit
      _
    %530 = vst [vmem:[#allocation2] sm:$0xff] %v93
    // Predicated region
    $region56: #{tpu_custom_call.1} parent=1 // pred_check
      _
    $region57: #{tpu_custom_call.1} parent=1 // pred_check_branch
      %532 = sbr.rel (0) target = $region59
    $region58: #{tpu_custom_call.1} parent=1 // pred_region
      %s534 = ssub.s32 1024, 1024
      %535 = vsyncadd [#allocation7], %s534
      %s536 = sshll.u32 [#allocation13], 4
      %s537 = int_to_ptr.vmem [resolvable:$true] %s536
      %542 = dma.vmem_to_hbm [thread:$0]  %s537, 1024, %s6, [#allocation7], 128, 128, 8
    $region59: #{tpu_custom_call.1} parent=1 // pred_fallthru
      _
    // Predicated region
    $region60: #{tpu_custom_call.1} parent=1 // pred_check
      _
    $region61: #{tpu_custom_call.1} parent=1 // pred_check_branch
      %544 = sbr.rel (0) target = $region63
    $region62: #{tpu_custom_call.1} parent=1 // pred_region
      %545 = dma.done [#allocation7], 1024
    $region63: #{tpu_custom_call.1} parent=1 // pred_fallthru
      _
    %546 = vsyncpa [#allocation6], 1
    %547 = vsyncpa [#allocation9], 1
    %548 = vsyncpa [#allocation12], 1
    %549 = vsyncpa [#allocation7], 1

</llo_original>
